<compile_context>
chip_gen: v7x
topology: tpu7x:2x2x1
jax: 0.10.0
libtpu: 0.0.40
codegen_flags: <defaults>
</compile_context>

<pallas_src>
import functools
import math

import jax
import jax.numpy as jnp
from jax.experimental import pallas as pl
from jax.experimental.pallas import tpu as pltpu


def _ffn_kernel(x_ref, w1_ref, b1_ref, w2_ref, b2_ref, o_ref):
    # Linear 1 (bf16 MXU inputs, f32 accumulate) + bias + ReLU
    x = x_ref[...].astype(jnp.bfloat16)
    h = jnp.dot(x, w1_ref[...], preferred_element_type=jnp.float32) + b1_ref[...]
    h = jnp.maximum(h, 0.0)
    # Linear 2
    y = jnp.dot(h.astype(jnp.bfloat16), w2_ref[...],
                preferred_element_type=jnp.float32) + b2_ref[...]
    o_ref[...] = y.astype(o_ref.dtype)


def _ffn_dropout_kernel(x_ref, w1_ref, b1_ref, w2_ref, b2_ref, bits_ref, o_ref,
                        *, dropout_p: float):
    x = x_ref[...].astype(jnp.bfloat16)
    h = jnp.dot(x, w1_ref[...], preferred_element_type=jnp.float32) + b1_ref[...]
    h = jnp.maximum(h, 0.0)
    y = jnp.dot(h.astype(jnp.bfloat16), w2_ref[...],
                preferred_element_type=jnp.float32) + b2_ref[...]
    # Inverted dropout: drop iff bits < p * 2^32 (integer-domain compare);
    # fold the 1/(1-p) scale into the kept branch (single select + mul).
    threshold = jnp.uint32(min(int(dropout_p * (2 ** 32)), 2 ** 32 - 1))
    keep = bits_ref[...] >= threshold
    y = jnp.where(keep, y * (1.0 / (1.0 - dropout_p)), 0.0)
    o_ref[...] = y.astype(o_ref.dtype)


def feedforward_pallas(x, w1, b1, w2, b2, *, dropout_p=0.1, training=False,
                       dropout_key=None, block_m=512):
    """x: (B, T, C) float32; w1:(C,4C) w2:(4C,C) stored (in, out). Returns (B, T, C)."""
    B, T, C = x.shape
    H = w1.shape[1]
    M = B * T
    x2 = x.reshape(M, C)

    # Tile the M (token) dimension; weights stay resident across all tiles.
    tm = M if M <= block_m else block_m
    grid = (pl.cdiv(M, tm),)

    x_spec = pl.BlockSpec((tm, C), lambda i: (i, 0))
    out_spec = pl.BlockSpec((tm, C), lambda i: (i, 0))
    w1_spec = pl.BlockSpec((C, H), lambda i: (0, 0))   # same block every step
    b1_spec = pl.BlockSpec((1, H), lambda i: (0, 0))   # -> DMA'd once,
    w2_spec = pl.BlockSpec((H, C), lambda i: (0, 0))   #    VMEM-resident
    b2_spec = pl.BlockSpec((1, C), lambda i: (0, 0))

    compiler_params = None
    if jax.default_backend() == "tpu":
        # M tiles are independent: let megacore (v7x: 2 TCs/chip) split them.
        compiler_params = pltpu.CompilerParams(
            dimension_semantics=("parallel",))

    # bf16 weights: native MXU input format, halves weight HBM/VMEM traffic.
    w1b = w1.astype(jnp.bfloat16)
    w2b = w2.astype(jnp.bfloat16)

    if training and dropout_p > 0.0:
        if dropout_key is None:
            dropout_key = jax.random.PRNGKey(0)
        bits = jax.random.bits(dropout_key, (M, C), dtype=jnp.uint32)
        kernel = functools.partial(_ffn_dropout_kernel, dropout_p=dropout_p)
        out = pl.pallas_call(
            kernel,
            out_shape=jax.ShapeDtypeStruct((M, C), x.dtype),
            grid=grid,
            in_specs=[x_spec, w1_spec, b1_spec, w2_spec, b2_spec,
                      pl.BlockSpec((tm, C), lambda i: (i, 0))],
            out_specs=out_spec,
            compiler_params=compiler_params,
        )(x2, w1b, b1, w2b, b2, bits)
    else:
        out = pl.pallas_call(
            _ffn_kernel,
            out_shape=jax.ShapeDtypeStruct((M, C), x.dtype),
            grid=grid,
            in_specs=[x_spec, w1_spec, b1_spec, w2_spec, b2_spec],
            out_specs=out_spec,
            compiler_params=compiler_params,
        )(x2, w1b, b1, w2b, b2)
    return out.reshape(B, T, C)


def init_params(key, n_embd):
    """Deterministic params, matching PyTorch nn.Linear default init ranges."""
    k1, k2, k3, k4 = jax.random.split(key, 4)
    hidden = 4 * n_embd
    bound1 = 1.0 / math.sqrt(n_embd)
    bound2 = 1.0 / math.sqrt(hidden)
    # stored as (in, out) so the kernel does x @ W directly
    w1 = jax.random.uniform(k1, (n_embd, hidden), jnp.float32, -bound1, bound1)
    b1 = jax.random.uniform(k2, (1, hidden), jnp.float32, -bound1, bound1)
    w2 = jax.random.uniform(k3, (hidden, n_embd), jnp.float32, -bound2, bound2)
    b2 = jax.random.uniform(k4, (1, n_embd), jnp.float32, -bound2, bound2)
    return w1, b1, w2, b2


def feedforward_ref(x, w1, b1, w2, b2):
    """Pure-JAX reference mirroring the kernel's bf16-in / f32-accum matmuls
    (dropout in eval mode == identity)."""
    xb = x.astype(jnp.bfloat16)
    h = jnp.dot(xb, w1.astype(jnp.bfloat16),
                preferred_element_type=jnp.float32) + b1
    h = jnp.maximum(h, 0.0)
    y = jnp.dot(h.astype(jnp.bfloat16), w2.astype(jnp.bfloat16),
                preferred_element_type=jnp.float32) + b2
    return y


if __name__ == "__main__":
    n_embd = 256          # matches the module's global n_embd
    B, T = 2, 8           # small batch / sequence

    key = jax.random.PRNGKey(0)
    kx, kp, kd = jax.random.split(key, 3)
    x = jax.random.normal(kx, (B, T, n_embd), jnp.float32)
    w1, b1, w2, b2 = init_params(kp, n_embd)

    # Eval mode (dropout = identity): check against the pure-JAX reference.
    y_eval = feedforward_pallas(x, w1, b1, w2, b2, dropout_p=0.1, training=False)
    jax.block_until_ready(y_eval)
    y_ref = feedforward_ref(x, w1, b1, w2, b2)
    assert y_eval.shape == (B, T, n_embd)
    assert jnp.allclose(y_eval, y_ref, atol=5e-3, rtol=5e-3), "mismatch vs reference"

    # Training mode: in-kernel inverted dropout driven by streamed random bits.
    p = 0.1
    y_train = feedforward_pallas(x, w1, b1, w2, b2, dropout_p=p, training=True,
                                 dropout_key=kd)
    jax.block_until_ready(y_train)
    assert y_train.shape == (B, T, n_embd)
    kept = (y_train != 0.0)
    keep_frac = float(jnp.mean(kept.astype(jnp.float32)))
    assert 0.80 < keep_frac < 0.97, f"unexpected keep fraction {keep_frac}"
    scaled_ref = y_ref * (1.0 / (1.0 - p))
    assert jnp.allclose(jnp.where(kept, y_train, 0.0),
                        jnp.where(kept, scaled_ref, 0.0),
                        atol=5e-3, rtol=5e-3), "dropout kept values mismatch"

    print("KERNEL_OK")
</pallas_src>

<mosaic_0001>
module attributes {stable_mosaic.version = 11 : i64} {
  func.func @_ffn_kernel(%arg0: i32, %arg1: memref<16x256xf32, #tpu.memory_space<vmem>>, %arg2: memref<256x1024xbf16, #tpu.memory_space<vmem>>, %arg3: memref<1x1024xf32, #tpu.memory_space<vmem>>, %arg4: memref<1024x256xbf16, #tpu.memory_space<vmem>>, %arg5: memref<1x256xf32, #tpu.memory_space<vmem>>, %arg6: memref<16x256xf32, #tpu.memory_space<vmem>>) attributes {dimension_semantics = [#tpu.dimension_semantics<arbitrary>], iteration_bounds = array<i64: 1>, scalar_prefetch = 0 : i64, scratch_operands = 0 : i64, tpu.core_type = #tpu.core_type<tc>, window_params = [{transform_indices = @transform_0, window_bounds = array<i64: 16, 256>}, {pipeline_mode = #tpu.pipeline_mode<synchronous>, transform_indices = @transform_1, window_bounds = array<i64: 256, 1024>}, {pipeline_mode = #tpu.pipeline_mode<synchronous>, transform_indices = @transform_2, window_bounds = array<i64: 1, 1024>}, {pipeline_mode = #tpu.pipeline_mode<synchronous>, transform_indices = @transform_3, window_bounds = array<i64: 1024, 256>}, {pipeline_mode = #tpu.pipeline_mode<synchronous>, transform_indices = @transform_4, window_bounds = array<i64: 1, 256>}, {transform_indices = @transform_5, window_bounds = array<i64: 16, 256>}]} {
    %c0 = arith.constant 0 : index
    %c0_0 = arith.constant 0 : index
    %0 = vector.load %arg1[%c0, %c0_0] : memref<16x256xf32, #tpu.memory_space<vmem>>, vector<16x256xf32>
    %1 = arith.truncf %0 : vector<16x256xf32> to vector<16x256xbf16>
    %c0_1 = arith.constant 0 : index
    %c0_2 = arith.constant 0 : index
    %2 = vector.load %arg2[%c0_1, %c0_2] : memref<256x1024xbf16, #tpu.memory_space<vmem>>, vector<256x1024xbf16>
    %cst = arith.constant dense<0.000000e+00> : vector<16x1024xf32>
    %3 = tpu.matmul %1, %2, %cst {dimension_numbers = #tpu.dot_dimension_numbers<[1], [0], [0], [1], [0, 0, 1, 1], [], []>} : vector<16x256xbf16>, vector<256x1024xbf16>, vector<16x1024xf32> -> vector<16x1024xf32>
    %c0_3 = arith.constant 0 : index
    %c0_4 = arith.constant 0 : index
    %4 = vector.load %arg3[%c0_3, %c0_4] : memref<1x1024xf32, #tpu.memory_space<vmem>>, vector<1x1024xf32>
    %5 = vector.broadcast %4 : vector<1x1024xf32> to vector<16x1024xf32>
    %6 = arith.addf %3, %5 : vector<16x1024xf32>
    %cst_5 = arith.constant 0.000000e+00 : f32
    %7 = vector.broadcast %cst_5 : f32 to vector<16x1024xf32>
    %8 = arith.maximumf %6, %7 : vector<16x1024xf32>
    %9 = arith.truncf %8 : vector<16x1024xf32> to vector<16x1024xbf16>
    %c0_6 = arith.constant 0 : index
    %c0_7 = arith.constant 0 : index
    %10 = vector.load %arg4[%c0_6, %c0_7] : memref<1024x256xbf16, #tpu.memory_space<vmem>>, vector<1024x256xbf16>
    %cst_8 = arith.constant dense<0.000000e+00> : vector<16x256xf32>
    %11 = tpu.matmul %9, %10, %cst_8 {dimension_numbers = #tpu.dot_dimension_numbers<[1], [0], [0], [1], [0, 0, 1, 1], [], []>} : vector<16x1024xbf16>, vector<1024x256xbf16>, vector<16x256xf32> -> vector<16x256xf32>
    %c0_9 = arith.constant 0 : index
    %c0_10 = arith.constant 0 : index
    %12 = vector.load %arg5[%c0_9, %c0_10] : memref<1x256xf32, #tpu.memory_space<vmem>>, vector<1x256xf32>
    %13 = vector.broadcast %12 : vector<1x256xf32> to vector<16x256xf32>
    %14 = arith.addf %11, %13 : vector<16x256xf32>
    %c0_11 = arith.constant 0 : index
    %c0_12 = arith.constant 0 : index
    %15 = vector.load %arg6[%c0_11, %c0_12] : memref<16x256xf32, #tpu.memory_space<vmem>>, vector<16x256xf32>
    tpu.vector_store %arg6[%c0_11, %c0_12], %14 {strides = array<i32>} : memref<16x256xf32, #tpu.memory_space<vmem>>, vector<16x256xf32>,
    return
  }
  func.func @transform_0(%arg0: i32) -> (i32, i32) {
    %c0_i32 = arith.constant 0 : i32
    %c0_i32_0 = arith.constant 0 : i32
    return %arg0, %c0_i32 : i32, i32
  }
  func.func @transform_1(%arg0: i32) -> (i32, i32) {
    %c0_i32 = arith.constant 0 : i32
    %c0_i32_0 = arith.constant 0 : i32
    %c0_i32_1 = arith.constant 0 : i32
    return %c0_i32, %c0_i32_0 : i32, i32
  }
  func.func @transform_2(%arg0: i32) -> (i32, i32) {
    %c0_i32 = arith.constant 0 : i32
    %c0_i32_0 = arith.constant 0 : i32
    %c0_i32_1 = arith.constant 0 : i32
    return %c0_i32, %c0_i32_0 : i32, i32
  }
  func.func @transform_3(%arg0: i32) -> (i32, i32) {
    %c0_i32 = arith.constant 0 : i32
    %c0_i32_0 = arith.constant 0 : i32
    %c0_i32_1 = arith.constant 0 : i32
    return %c0_i32, %c0_i32_0 : i32, i32
  }
  func.func @transform_4(%arg0: i32) -> (i32, i32) {
    %c0_i32 = arith.constant 0 : i32
    %c0_i32_0 = arith.constant 0 : i32
    %c0_i32_1 = arith.constant 0 : i32
    return %c0_i32, %c0_i32_0 : i32, i32
  }
  func.func @transform_5(%arg0: i32) -> (i32, i32) {
    %c0_i32 = arith.constant 0 : i32
    %c0_i32_0 = arith.constant 0 : i32
    return %arg0, %c0_i32 : i32, i32
  }
}

</mosaic_0001>

<llo_original>
// kernel: tpu_custom_call.1
$region0: #{tpu_custom_call.1}
  #allocation0 [shape = 'u32[]', space=smem, size = 0x4, offset = 0x4, fixed_abs, tag = 'smem constant byte address 0x4 - core index']
  #allocation1 [shape = 'u32[144,128]{1,0:T(1,128)}', space=vmem, size = 0x12000, scoped, tag = 'internal scratch']
  %s0 = inlined_call_operand.hbm [shape: f32[16,256], index: 0, kind: input, shape index: {}]
  %s1 = inlined_call_operand.hbm [shape: bf16[256,1024], index: 1, kind: input, shape index: {}]
  %s2 = inlined_call_operand.hbm [shape: f32[1,1024], index: 2, kind: input, shape index: {}]
  %s3 = inlined_call_operand.hbm [shape: bf16[1024,256], index: 3, kind: input, shape index: {}]
  %s4 = inlined_call_operand.vmem [shape: f32[1,256], index: 4, kind: input, shape index: {}]
  %s5 = inlined_call_operand.hbm [shape: f32[16,256], index: 5, kind: output, shape index: {}]
  %s6 = sld [smem:[#allocation0]]
  $region46: #{tpu_custom_call.1} parent=0
    _
  %s8 = ssub.s32 1, %s6
  %s9 = scalar_select 0, %s8, %s6
  $region1: #{tpu_custom_call.1} parent=0
    #allocation2 [shape = 'u8[16384]{0}', space=vmem, size = 0x4000, scoped, tag = 'input window, operand 0, single buffered']
    #allocation3 [shape = 's32[1]{0}', space=sflag, size = 0x4, scoped, tag = 'scoped memory for tpu_custom_call.1']
    #allocation4 [shape = 's32[1]{0}', space=sflag, size = 0x4, scoped, tag = 'scoped memory for tpu_custom_call.1']
    #allocation5 [shape = 'u8[524288]{0}', space=vmem, size = 0x80000, scoped, tag = 'input window, operand 1, single buffered']
    #allocation6 [shape = 's32[1]{0}', space=sflag, size = 0x4, scoped, tag = 'scoped memory for tpu_custom_call.1']
    #allocation7 [shape = 'u8[4096]{0}', space=vmem, size = 0x1000, scoped, tag = 'input window, operand 2, single buffered']
    #allocation8 [shape = 'u8[524288]{0}', space=vmem, size = 0x80000, scoped, tag = 'input window, operand 3, single buffered']
    #allocation9 [shape = 's32[1]{0}', space=sflag, size = 0x4, scoped, tag = 'scoped memory for tpu_custom_call.1']
    #allocation10 [shape = 'u8[16384]{0}', space=vmem, size = 0x4000, scoped, tag = 'output window, operand 0, single buffered']
    %10 = vsyncpa [#allocation3], 0
    %11 = vsyncpa [#allocation6], 0
    %12 = vsyncpa [#allocation9], 0
    %13 = vsyncpa [#allocation4], 0
    // Predicated region
    $region2: #{tpu_custom_call.1} parent=1 // pred_check
      _
    $region3: #{tpu_custom_call.1} parent=1 // pred_check_branch
      %15 = sbr.rel (0) target = $region5
    $region4: #{tpu_custom_call.1} parent=1 // pred_region
      %s17 = ssub.s32 512, 512
      %18 = vsyncadd [#allocation3], %s17
      %s19 = sshll.u32 [#allocation2], 4
      %s20 = int_to_ptr.vmem [resolvable:$true] %s19
      %25 = dma.hbm_to_vmem [thread:$0]  %s0, 512, %s20, [#allocation3], 256, 256, 16
    $region5: #{tpu_custom_call.1} parent=1 // pred_fallthru
      _
    // Predicated region
    $region6: #{tpu_custom_call.1} parent=1 // pred_check
      _
    $region7: #{tpu_custom_call.1} parent=1 // pred_check_branch
      %27 = sbr.rel (0) target = $region9
    $region8: #{tpu_custom_call.1} parent=1 // pred_region
      %s29 = ssub.s32 16384, 16384
      %30 = vsyncadd [#allocation6], %s29
      %s31 = sshll.u32 [#allocation5], 4
      %s32 = int_to_ptr.vmem [resolvable:$true] %s31
      %37 = dma.hbm_to_vmem [thread:$0]  %s1, 16384, %s32, [#allocation6], 512, 512, 32
    $region9: #{tpu_custom_call.1} parent=1 // pred_fallthru
      _
    // Predicated region
    $region10: #{tpu_custom_call.1} parent=1 // pred_check
      _
    $region11: #{tpu_custom_call.1} parent=1 // pred_check_branch
      %39 = sbr.rel (0) target = $region13
    $region12: #{tpu_custom_call.1} parent=1 // pred_region
      %s41 = ssub.s32 128, 128
      %42 = vsyncadd [#allocation6], %s41
      %s44 = sshll.u32 [#allocation7], 4
      %s45 = int_to_ptr.vmem [resolvable:$true] %s44
      %47 = dma.hbm_to_vmem [thread:$0]  %s2, 128, %s45, [#allocation6]
    $region13: #{tpu_custom_call.1} parent=1 // pred_fallthru
      _
    // Predicated region
    $region14: #{tpu_custom_call.1} parent=1 // pred_check
      _
    $region15: #{tpu_custom_call.1} parent=1 // pred_check_branch
      %49 = sbr.rel (0) target = $region17
    $region16: #{tpu_custom_call.1} parent=1 // pred_region
      %s51 = ssub.s32 16384, 16384
      %52 = vsyncadd [#allocation9], %s51
      %s53 = sshll.u32 [#allocation8], 4
      %s54 = int_to_ptr.vmem [resolvable:$true] %s53
      %59 = dma.hbm_to_vmem [thread:$0]  %s3, 16384, %s54, [#allocation9], 128, 128, 8
    $region17: #{tpu_custom_call.1} parent=1 // pred_fallthru
      _
    // Predicated region
    $region18: #{tpu_custom_call.1} parent=1 // pred_check
      _
    $region19: #{tpu_custom_call.1} parent=1 // pred_check_branch
      %61 = sbr.rel (0) target = $region21
    $region20: #{tpu_custom_call.1} parent=1 // pred_region
      _
    $region21: #{tpu_custom_call.1} parent=1 // pred_fallthru
      _
    // Predicated region
    $region22: #{tpu_custom_call.1} parent=1 // pred_check
      _
    $region23: #{tpu_custom_call.1} parent=1 // pred_check_branch
      %63 = sbr.rel (0) target = $region25
    $region24: #{tpu_custom_call.1} parent=1 // pred_region
      %64 = dma.done [#allocation3], 512
    $region25: #{tpu_custom_call.1} parent=1 // pred_fallthru
      _
    // Predicated region
    $region26: #{tpu_custom_call.1} parent=1 // pred_check
      _
    $region27: #{tpu_custom_call.1} parent=1 // pred_check_branch
      %66 = sbr.rel (0) target = $region29
    $region28: #{tpu_custom_call.1} parent=1 // pred_region
      %67 = dma.done [#allocation6], 16384
    $region29: #{tpu_custom_call.1} parent=1 // pred_fallthru
      _
    // Predicated region
    $region30: #{tpu_custom_call.1} parent=1 // pred_check
      _
    $region31: #{tpu_custom_call.1} parent=1 // pred_check_branch
      %69 = sbr.rel (0) target = $region33
    $region32: #{tpu_custom_call.1} parent=1 // pred_region
      %70 = dma.done [#allocation6], 128
    $region33: #{tpu_custom_call.1} parent=1 // pred_fallthru
      _
    // Predicated region
    $region34: #{tpu_custom_call.1} parent=1 // pred_check
      _
    $region35: #{tpu_custom_call.1} parent=1 // pred_check_branch
      %72 = sbr.rel (0) target = $region37
    $region36: #{tpu_custom_call.1} parent=1 // pred_region
      %73 = dma.done [#allocation9], 16384
    $region37: #{tpu_custom_call.1} parent=1 // pred_fallthru
      _
    %v74 = vld [vmem:[#allocation2] sm:$0xff]
    %v75 = vld [vmem:[#allocation2 + $0x8] sm:$0xff]
    %v76 = vld [vmem:[#allocation2 + $0x10] sm:$0xff]
    %v77 = vld [vmem:[#allocation2 + $0x18] sm:$0xff]
    %v78 = vpack.c.bf16 %v76, %v74
    %v79 = vpack.c.bf16 %v77, %v75
    %v80 = vld [vmem:[#allocation5] sm:$0xff]
    %v81 = vld [vmem:[#allocation5 + $0x8] sm:$0xff]
    %v82 = vld [vmem:[#allocation5 + $0x10] sm:$0xff]
    %v83 = vld [vmem:[#allocation5 + $0x18] sm:$0xff]
    %v84 = vld [vmem:[#allocation5 + $0x20] sm:$0xff]
    %v85 = vld [vmem:[#allocation5 + $0x28] sm:$0xff]
    %v86 = vld [vmem:[#allocation5 + $0x30] sm:$0xff]
    %v87 = vld [vmem:[#allocation5 + $0x38] sm:$0xff]
    %v88 = vld [vmem:[#allocation5 + $0x40] sm:$0xff]
    %v89 = vld [vmem:[#allocation5 + $0x48] sm:$0xff]
    %v90 = vld [vmem:[#allocation5 + $0x50] sm:$0xff]
    %v91 = vld [vmem:[#allocation5 + $0x58] sm:$0xff]
    %v92 = vld [vmem:[#allocation5 + $0x60] sm:$0xff]
    %v93 = vld [vmem:[#allocation5 + $0x68] sm:$0xff]
    %v94 = vld [vmem:[#allocation5 + $0x70] sm:$0xff]
    %v95 = vld [vmem:[#allocation5 + $0x78] sm:$0xff]
    %v96 = vld [vmem:[#allocation5 + $0x80] sm:$0xff]
    %v97 = vld [vmem:[#allocation5 + $0x88] sm:$0xff]
    %v98 = vld [vmem:[#allocation5 + $0x90] sm:$0xff]
    %v99 = vld [vmem:[#allocation5 + $0x98] sm:$0xff]
    %v100 = vld [vmem:[#allocation5 + $0xa0] sm:$0xff]
    %v101 = vld [vmem:[#allocation5 + $0xa8] sm:$0xff]
    %v102 = vld [vmem:[#allocation5 + $0xb0] sm:$0xff]
    %v103 = vld [vmem:[#allocation5 + $0xb8] sm:$0xff]
    %v104 = vld [vmem:[#allocation5 + $0xc0] sm:$0xff]
    %v105 = vld [vmem:[#allocation5 + $0xc8] sm:$0xff]
    %v106 = vld [vmem:[#allocation5 + $0xd0] sm:$0xff]
    %v107 = vld [vmem:[#allocation5 + $0xd8] sm:$0xff]
    %v108 = vld [vmem:[#allocation5 + $0xe0] sm:$0xff]
    %v109 = vld [vmem:[#allocation5 + $0xe8] sm:$0xff]
    %v110 = vld [vmem:[#allocation5 + $0xf0] sm:$0xff]
    %v111 = vld [vmem:[#allocation5 + $0xf8] sm:$0xff]
    %v112 = vld [vmem:[#allocation5 + $0x100] sm:$0xff]
    %v113 = vld [vmem:[#allocation5 + $0x108] sm:$0xff]
    %v114 = vld [vmem:[#allocation5 + $0x110] sm:$0xff]
    %v115 = vld [vmem:[#allocation5 + $0x118] sm:$0xff]
    %v116 = vld [vmem:[#allocation5 + $0x120] sm:$0xff]
    %v117 = vld [vmem:[#allocation5 + $0x128] sm:$0xff]
    %v118 = vld [vmem:[#allocation5 + $0x130] sm:$0xff]
    %v119 = vld [vmem:[#allocation5 + $0x138] sm:$0xff]
    %v120 = vld [vmem:[#allocation5 + $0x140] sm:$0xff]
    %v121 = vld [vmem:[#allocation5 + $0x148] sm:$0xff]
    %v122 = vld [vmem:[#allocation5 + $0x150] sm:$0xff]
    %v123 = vld [vmem:[#allocation5 + $0x158] sm:$0xff]
    %v124 = vld [vmem:[#allocation5 + $0x160] sm:$0xff]
    %v125 = vld [vmem:[#allocation5 + $0x168] sm:$0xff]
    %v126 = vld [vmem:[#allocation5 + $0x170] sm:$0xff]
    %v127 = vld [vmem:[#allocation5 + $0x178] sm:$0xff]
    %v128 = vld [vmem:[#allocation5 + $0x180] sm:$0xff]
    %v129 = vld [vmem:[#allocation5 + $0x188] sm:$0xff]
    %v130 = vld [vmem:[#allocation5 + $0x190] sm:$0xff]
    %v131 = vld [vmem:[#allocation5 + $0x198] sm:$0xff]
    %v132 = vld [vmem:[#allocation5 + $0x1a0] sm:$0xff]
    %v133 = vld [vmem:[#allocation5 + $0x1a8] sm:$0xff]
    %v134 = vld [vmem:[#allocation5 + $0x1b0] sm:$0xff]
    %v135 = vld [vmem:[#allocation5 + $0x1b8] sm:$0xff]
    %v136 = vld [vmem:[#allocation5 + $0x1c0] sm:$0xff]
    %v137 = vld [vmem:[#allocation5 + $0x1c8] sm:$0xff]
    %v138 = vld [vmem:[#allocation5 + $0x1d0] sm:$0xff]
    %v139 = vld [vmem:[#allocation5 + $0x1d8] sm:$0xff]
    %v140 = vld [vmem:[#allocation5 + $0x1e0] sm:$0xff]
    %v141 = vld [vmem:[#allocation5 + $0x1e8] sm:$0xff]
    %v142 = vld [vmem:[#allocation5 + $0x1f0] sm:$0xff]
    %v143 = vld [vmem:[#allocation5 + $0x1f8] sm:$0xff]
    %v144 = vld [vmem:[#allocation5 + $0x200] sm:$0xff]
    %v145 = vld [vmem:[#allocation5 + $0x208] sm:$0xff]
    %v146 = vld [vmem:[#allocation5 + $0x210] sm:$0xff]
    %v147 = vld [vmem:[#allocation5 + $0x218] sm:$0xff]
    %v148 = vld [vmem:[#allocation5 + $0x220] sm:$0xff]
    %v149 = vld [vmem:[#allocation5 + $0x228] sm:$0xff]
    %v150 = vld [vmem:[#allocation5 + $0x230] sm:$0xff]
    %v151 = vld [vmem:[#allocation5 + $0x238] sm:$0xff]
    %v152 = vld [vmem:[#allocation5 + $0x240] sm:$0xff]
    %v153 = vld [vmem:[#allocation5 + $0x248] sm:$0xff]
    %v154 = vld [vmem:[#allocation5 + $0x250] sm:$0xff]
    %v155 = vld [vmem:[#allocation5 + $0x258] sm:$0xff]
    %v156 = vld [vmem:[#allocation5 + $0x260] sm:$0xff]
    %v157 = vld [vmem:[#allocation5 + $0x268] sm:$0xff]
    %v158 = vld [vmem:[#allocation5 + $0x270] sm:$0xff]
    %v159 = vld [vmem:[#allocation5 + $0x278] sm:$0xff]
    %v160 = vld [vmem:[#allocation5 + $0x280] sm:$0xff]
    %v161 = vld [vmem:[#allocation5 + $0x288] sm:$0xff]
    %v162 = vld [vmem:[#allocation5 + $0x290] sm:$0xff]
    %v163 = vld [vmem:[#allocation5 + $0x298] sm:$0xff]
    %v164 = vld [vmem:[#allocation5 + $0x2a0] sm:$0xff]
    %v165 = vld [vmem:[#allocation5 + $0x2a8] sm:$0xff]
    %v166 = vld [vmem:[#allocation5 + $0x2b0] sm:$0xff]
    %v167 = vld [vmem:[#allocation5 + $0x2b8] sm:$0xff]
    %v168 = vld [vmem:[#allocation5 + $0x2c0] sm:$0xff]
    %v169 = vld [vmem:[#allocation5 + $0x2c8] sm:$0xff]
    %v170 = vld [vmem:[#allocation5 + $0x2d0] sm:$0xff]
    %v171 = vld [vmem:[#allocation5 + $0x2d8] sm:$0xff]
    %v172 = vld [vmem:[#allocation5 + $0x2e0] sm:$0xff]
    %v173 = vld [vmem:[#allocation5 + $0x2e8] sm:$0xff]
    %v174 = vld [vmem:[#allocation5 + $0x2f0] sm:$0xff]
    %v175 = vld [vmem:[#allocation5 + $0x2f8] sm:$0xff]
    %v176 = vld [vmem:[#allocation5 + $0x300] sm:$0xff]
    %v177 = vld [vmem:[#allocation5 + $0x308] sm:$0xff]
    %v178 = vld [vmem:[#allocation5 + $0x310] sm:$0xff]
    %v179 = vld [vmem:[#allocation5 + $0x318] sm:$0xff]
    %v180 = vld [vmem:[#allocation5 + $0x320] sm:$0xff]
    %v181 = vld [vmem:[#allocation5 + $0x328] sm:$0xff]
    %v182 = vld [vmem:[#allocation5 + $0x330] sm:$0xff]
    %v183 = vld [vmem:[#allocation5 + $0x338] sm:$0xff]
    %v184 = vld [vmem:[#allocation5 + $0x340] sm:$0xff]
    %v185 = vld [vmem:[#allocation5 + $0x348] sm:$0xff]
    %v186 = vld [vmem:[#allocation5 + $0x350] sm:$0xff]
    %v187 = vld [vmem:[#allocation5 + $0x358] sm:$0xff]
    %v188 = vld [vmem:[#allocation5 + $0x360] sm:$0xff]
    %v189 = vld [vmem:[#allocation5 + $0x368] sm:$0xff]
    %v190 = vld [vmem:[#allocation5 + $0x370] sm:$0xff]
    %v191 = vld [vmem:[#allocation5 + $0x378] sm:$0xff]
    %v192 = vld [vmem:[#allocation5 + $0x380] sm:$0xff]
    %v193 = vld [vmem:[#allocation5 + $0x388] sm:$0xff]
    %v194 = vld [vmem:[#allocation5 + $0x390] sm:$0xff]
    %v195 = vld [vmem:[#allocation5 + $0x398] sm:$0xff]
    %v196 = vld [vmem:[#allocation5 + $0x3a0] sm:$0xff]
    %v197 = vld [vmem:[#allocation5 + $0x3a8] sm:$0xff]
    %v198 = vld [vmem:[#allocation5 + $0x3b0] sm:$0xff]
    %v199 = vld [vmem:[#allocation5 + $0x3b8] sm:$0xff]
    %v200 = vld [vmem:[#allocation5 + $0x3c0] sm:$0xff]
    %v201 = vld [vmem:[#allocation5 + $0x3c8] sm:$0xff]
    %v202 = vld [vmem:[#allocation5 + $0x3d0] sm:$0xff]
    %v203 = vld [vmem:[#allocation5 + $0x3d8] sm:$0xff]
    %v204 = vld [vmem:[#allocation5 + $0x3e0] sm:$0xff]
    %v205 = vld [vmem:[#allocation5 + $0x3e8] sm:$0xff]
    %v206 = vld [vmem:[#allocation5 + $0x3f0] sm:$0xff]
    %v207 = vld [vmem:[#allocation5 + $0x3f8] sm:$0xff]
    %v208 = vld [vmem:[#allocation7] sm:$0xff]
    %v210 = vlaneseq
    %v211 = vshrl.u32 %v210, 7
    %v212 = vsub.s32 0, %v211
    %v213 = vrot.slane %v208, %v212
    %v214 = vlaneseq
    %v215 = vshrl.u32 %v214, 7
    %v216 = vsub.s32 1, %v215
    %v217 = vrot.slane %v208, %v216
    %v218 = vlaneseq
    %v219 = vshrl.u32 %v218, 7
    %v220 = vsub.s32 2, %v219
    %v221 = vrot.slane %v208, %v220
    %v222 = vlaneseq
    %v223 = vshrl.u32 %v222, 7
    %v224 = vsub.s32 3, %v223
    %v225 = vrot.slane %v208, %v224
    %v226 = vlaneseq
    %v227 = vshrl.u32 %v226, 7
    %v228 = vsub.s32 4, %v227
    %v229 = vrot.slane %v208, %v228
    %v230 = vlaneseq
    %v231 = vshrl.u32 %v230, 7
    %v232 = vsub.s32 5, %v231
    %v233 = vrot.slane %v208, %v232
    %v234 = vlaneseq
    %v235 = vshrl.u32 %v234, 7
    %v236 = vsub.s32 6, %v235
    %v237 = vrot.slane %v208, %v236
    %v238 = vlaneseq
    %v239 = vshrl.u32 %v238, 7
    %v240 = vsub.s32 7, %v239
    %v241 = vrot.slane %v208, %v240
    %v378 = vunpack.c.l.b16 %v80
    %v379 = vunpack.c.h.b16 %v80
    %v380 = vunpack.c.l.b16 %v81
    %v381 = vunpack.c.h.b16 %v81
    %v382 = vunpack.c.l.b16 %v82
    %v383 = vunpack.c.h.b16 %v82
    %v384 = vunpack.c.l.b16 %v83
    %v385 = vunpack.c.h.b16 %v83
    %v386 = vunpack.c.l.b16 %v84
    %v387 = vunpack.c.h.b16 %v84
    %v388 = vunpack.c.l.b16 %v85
    %v389 = vunpack.c.h.b16 %v85
    %v390 = vunpack.c.l.b16 %v86
    %v391 = vunpack.c.h.b16 %v86
    %v392 = vunpack.c.l.b16 %v87
    %v393 = vunpack.c.h.b16 %v87
    %v394 = vunpack.c.l.b16 %v88
    %v395 = vunpack.c.h.b16 %v88
    %v396 = vunpack.c.l.b16 %v89
    %v397 = vunpack.c.h.b16 %v89
    %v398 = vunpack.c.l.b16 %v90
    %v399 = vunpack.c.h.b16 %v90
    %v400 = vunpack.c.l.b16 %v91
    %v401 = vunpack.c.h.b16 %v91
    %v402 = vunpack.c.l.b16 %v92
    %v403 = vunpack.c.h.b16 %v92
    %v404 = vunpack.c.l.b16 %v93
    %v405 = vunpack.c.h.b16 %v93
    %v406 = vunpack.c.l.b16 %v94
    %v407 = vunpack.c.h.b16 %v94
    %v408 = vunpack.c.l.b16 %v95
    %v409 = vunpack.c.h.b16 %v95
    %v410 = vunpack.c.l.b16 %v96
    %v411 = vunpack.c.h.b16 %v96
    %v412 = vunpack.c.l.b16 %v97
    %v413 = vunpack.c.h.b16 %v97
    %v414 = vunpack.c.l.b16 %v98
    %v415 = vunpack.c.h.b16 %v98
    %v416 = vunpack.c.l.b16 %v99
    %v417 = vunpack.c.h.b16 %v99
    %v418 = vunpack.c.l.b16 %v100
    %v419 = vunpack.c.h.b16 %v100
    %v420 = vunpack.c.l.b16 %v101
    %v421 = vunpack.c.h.b16 %v101
    %v422 = vunpack.c.l.b16 %v102
    %v423 = vunpack.c.h.b16 %v102
    %v424 = vunpack.c.l.b16 %v103
    %v425 = vunpack.c.h.b16 %v103
    %v426 = vunpack.c.l.b16 %v104
    %v427 = vunpack.c.h.b16 %v104
    %v428 = vunpack.c.l.b16 %v105
    %v429 = vunpack.c.h.b16 %v105
    %v430 = vunpack.c.l.b16 %v106
    %v431 = vunpack.c.h.b16 %v106
    %v432 = vunpack.c.l.b16 %v107
    %v433 = vunpack.c.h.b16 %v107
    %v434 = vunpack.c.l.b16 %v108
    %v435 = vunpack.c.h.b16 %v108
    %v436 = vunpack.c.l.b16 %v109
    %v437 = vunpack.c.h.b16 %v109
    %v438 = vunpack.c.l.b16 %v110
    %v439 = vunpack.c.h.b16 %v110
    %v440 = vunpack.c.l.b16 %v111
    %v441 = vunpack.c.h.b16 %v111
    %v442 = vunpack.c.l.b16 %v112
    %v443 = vunpack.c.h.b16 %v112
    %v444 = vunpack.c.l.b16 %v113
    %v445 = vunpack.c.h.b16 %v113
    %v446 = vunpack.c.l.b16 %v114
    %v447 = vunpack.c.h.b16 %v114
    %v448 = vunpack.c.l.b16 %v115
    %v449 = vunpack.c.h.b16 %v115
    %v450 = vunpack.c.l.b16 %v116
    %v451 = vunpack.c.h.b16 %v116
    %v452 = vunpack.c.l.b16 %v117
    %v453 = vunpack.c.h.b16 %v117
    %v454 = vunpack.c.l.b16 %v118
    %v455 = vunpack.c.h.b16 %v118
    %v456 = vunpack.c.l.b16 %v119
    %v457 = vunpack.c.h.b16 %v119
    %v458 = vunpack.c.l.b16 %v120
    %v459 = vunpack.c.h.b16 %v120
    %v460 = vunpack.c.l.b16 %v121
    %v461 = vunpack.c.h.b16 %v121
    %v462 = vunpack.c.l.b16 %v122
    %v463 = vunpack.c.h.b16 %v122
    %v464 = vunpack.c.l.b16 %v123
    %v465 = vunpack.c.h.b16 %v123
    %v466 = vunpack.c.l.b16 %v124
    %v467 = vunpack.c.h.b16 %v124
    %v468 = vunpack.c.l.b16 %v125
    %v469 = vunpack.c.h.b16 %v125
    %v470 = vunpack.c.l.b16 %v126
    %v471 = vunpack.c.h.b16 %v126
    %v472 = vunpack.c.l.b16 %v127
    %v473 = vunpack.c.h.b16 %v127
    %v474 = vunpack.c.l.b16 %v128
    %v475 = vunpack.c.h.b16 %v128
    %v476 = vunpack.c.l.b16 %v129
    %v477 = vunpack.c.h.b16 %v129
    %v478 = vunpack.c.l.b16 %v130
    %v479 = vunpack.c.h.b16 %v130
    %v480 = vunpack.c.l.b16 %v131
    %v481 = vunpack.c.h.b16 %v131
    %v482 = vunpack.c.l.b16 %v132
    %v483 = vunpack.c.h.b16 %v132
    %v484 = vunpack.c.l.b16 %v133
    %v485 = vunpack.c.h.b16 %v133
    %v486 = vunpack.c.l.b16 %v134
    %v487 = vunpack.c.h.b16 %v134
    %v488 = vunpack.c.l.b16 %v135
    %v489 = vunpack.c.h.b16 %v135
    %v490 = vunpack.c.l.b16 %v136
    %v491 = vunpack.c.h.b16 %v136
    %v492 = vunpack.c.l.b16 %v137
    %v493 = vunpack.c.h.b16 %v137
    %v494 = vunpack.c.l.b16 %v138
    %v495 = vunpack.c.h.b16 %v138
    %v496 = vunpack.c.l.b16 %v139
    %v497 = vunpack.c.h.b16 %v139
    %v498 = vunpack.c.l.b16 %v140
    %v499 = vunpack.c.h.b16 %v140
    %v500 = vunpack.c.l.b16 %v141
    %v501 = vunpack.c.h.b16 %v141
    %v502 = vunpack.c.l.b16 %v142
    %v503 = vunpack.c.h.b16 %v142
    %v504 = vunpack.c.l.b16 %v143
    %v505 = vunpack.c.h.b16 %v143
    %v506 = vunpack.c.l.b16 %v144
    %v507 = vunpack.c.h.b16 %v144
    %v508 = vunpack.c.l.b16 %v145
    %v509 = vunpack.c.h.b16 %v145
    %v510 = vunpack.c.l.b16 %v146
    %v511 = vunpack.c.h.b16 %v146
    %v512 = vunpack.c.l.b16 %v147
    %v513 = vunpack.c.h.b16 %v147
    %v514 = vunpack.c.l.b16 %v148
    %v515 = vunpack.c.h.b16 %v148
    %v516 = vunpack.c.l.b16 %v149
    %v517 = vunpack.c.h.b16 %v149
    %v518 = vunpack.c.l.b16 %v150
    %v519 = vunpack.c.h.b16 %v150
    %v520 = vunpack.c.l.b16 %v151
    %v521 = vunpack.c.h.b16 %v151
    %v522 = vunpack.c.l.b16 %v152
    %v523 = vunpack.c.h.b16 %v152
    %v524 = vunpack.c.l.b16 %v153
    %v525 = vunpack.c.h.b16 %v153
    %v526 = vunpack.c.l.b16 %v154
    %v527 = vunpack.c.h.b16 %v154
    %v528 = vunpack.c.l.b16 %v155
    %v529 = vunpack.c.h.b16 %v155
    %v530 = vunpack.c.l.b16 %v156
    %v531 = vunpack.c.h.b16 %v156
    %v532 = vunpack.c.l.b16 %v157
    %v533 = vunpack.c.h.b16 %v157
    %v534 = vunpack.c.l.b16 %v158
    %v535 = vunpack.c.h.b16 %v158
    %v536 = vunpack.c.l.b16 %v159
    %v537 = vunpack.c.h.b16 %v159
    %v538 = vunpack.c.l.b16 %v160
    %v539 = vunpack.c.h.b16 %v160
    %v540 = vunpack.c.l.b16 %v161
    %v541 = vunpack.c.h.b16 %v161
    %v542 = vunpack.c.l.b16 %v162
    %v543 = vunpack.c.h.b16 %v162
    %v544 = vunpack.c.l.b16 %v163
    %v545 = vunpack.c.h.b16 %v163
    %v546 = vunpack.c.l.b16 %v164
    %v547 = vunpack.c.h.b16 %v164
    %v548 = vunpack.c.l.b16 %v165
    %v549 = vunpack.c.h.b16 %v165
    %v550 = vunpack.c.l.b16 %v166
    %v551 = vunpack.c.h.b16 %v166
    %v552 = vunpack.c.l.b16 %v167
    %v553 = vunpack.c.h.b16 %v167
    %v554 = vunpack.c.l.b16 %v168
    %v555 = vunpack.c.h.b16 %v168
    %v556 = vunpack.c.l.b16 %v169
    %v557 = vunpack.c.h.b16 %v169
    %v558 = vunpack.c.l.b16 %v170
    %v559 = vunpack.c.h.b16 %v170
    %v560 = vunpack.c.l.b16 %v171
    %v561 = vunpack.c.h.b16 %v171
    %v562 = vunpack.c.l.b16 %v172
    %v563 = vunpack.c.h.b16 %v172
    %v564 = vunpack.c.l.b16 %v173
    %v565 = vunpack.c.h.b16 %v173
    %v566 = vunpack.c.l.b16 %v174
    %v567 = vunpack.c.h.b16 %v174
    %v568 = vunpack.c.l.b16 %v175
    %v569 = vunpack.c.h.b16 %v175
    %v570 = vunpack.c.l.b16 %v176
    %v571 = vunpack.c.h.b16 %v176
    %v572 = vunpack.c.l.b16 %v177
    %v573 = vunpack.c.h.b16 %v177
    %v574 = vunpack.c.l.b16 %v178
    %v575 = vunpack.c.h.b16 %v178
    %v576 = vunpack.c.l.b16 %v179
    %v577 = vunpack.c.h.b16 %v179
    %v578 = vunpack.c.l.b16 %v180
    %v579 = vunpack.c.h.b16 %v180
    %v580 = vunpack.c.l.b16 %v181
    %v581 = vunpack.c.h.b16 %v181
    %v582 = vunpack.c.l.b16 %v182
    %v583 = vunpack.c.h.b16 %v182
    %v584 = vunpack.c.l.b16 %v183
    %v585 = vunpack.c.h.b16 %v183
    %v586 = vunpack.c.l.b16 %v184
    %v587 = vunpack.c.h.b16 %v184
    %v588 = vunpack.c.l.b16 %v185
    %v589 = vunpack.c.h.b16 %v185
    %v590 = vunpack.c.l.b16 %v186
    %v591 = vunpack.c.h.b16 %v186
    %v592 = vunpack.c.l.b16 %v187
    %v593 = vunpack.c.h.b16 %v187
    %v594 = vunpack.c.l.b16 %v188
    %v595 = vunpack.c.h.b16 %v188
    %v596 = vunpack.c.l.b16 %v189
    %v597 = vunpack.c.h.b16 %v189
    %v598 = vunpack.c.l.b16 %v190
    %v599 = vunpack.c.h.b16 %v190
    %v600 = vunpack.c.l.b16 %v191
    %v601 = vunpack.c.h.b16 %v191
    %v602 = vunpack.c.l.b16 %v192
    %v603 = vunpack.c.h.b16 %v192
    %v604 = vunpack.c.l.b16 %v193
    %v605 = vunpack.c.h.b16 %v193
    %v606 = vunpack.c.l.b16 %v194
    %v607 = vunpack.c.h.b16 %v194
    %v608 = vunpack.c.l.b16 %v195
    %v609 = vunpack.c.h.b16 %v195
    %v610 = vunpack.c.l.b16 %v196
    %v611 = vunpack.c.h.b16 %v196
    %v612 = vunpack.c.l.b16 %v197
    %v613 = vunpack.c.h.b16 %v197
    %v614 = vunpack.c.l.b16 %v198
    %v615 = vunpack.c.h.b16 %v198
    %v616 = vunpack.c.l.b16 %v199
    %v617 = vunpack.c.h.b16 %v199
    %v618 = vunpack.c.l.b16 %v200
    %v619 = vunpack.c.h.b16 %v200
    %v620 = vunpack.c.l.b16 %v201
    %v621 = vunpack.c.h.b16 %v201
    %v622 = vunpack.c.l.b16 %v202
    %v623 = vunpack.c.h.b16 %v202
    %v624 = vunpack.c.l.b16 %v203
    %v625 = vunpack.c.h.b16 %v203
    %v626 = vunpack.c.l.b16 %v204
    %v627 = vunpack.c.h.b16 %v204
    %v628 = vunpack.c.l.b16 %v205
    %v629 = vunpack.c.h.b16 %v205
    %v630 = vunpack.c.l.b16 %v206
    %v631 = vunpack.c.h.b16 %v206
    %v632 = vunpack.c.l.b16 %v207
    %v633 = vunpack.c.h.b16 %v207
    %v634 = vpack.c.b16 %v386, %v378
    %v635 = vpack.c.b16 %v387, %v379
    %v636 = vpack.c.b16 %v388, %v380
    %v637 = vpack.c.b16 %v389, %v381
    %v638 = vpack.c.b16 %v390, %v382
    %v639 = vpack.c.b16 %v391, %v383
    %v640 = vpack.c.b16 %v392, %v384
    %v641 = vpack.c.b16 %v393, %v385
    %v642 = vpack.c.b16 %v402, %v394
    %v643 = vpack.c.b16 %v403, %v395
    %v644 = vpack.c.b16 %v404, %v396
    %v645 = vpack.c.b16 %v405, %v397
    %v646 = vpack.c.b16 %v406, %v398
    %v647 = vpack.c.b16 %v407, %v399
    %v648 = vpack.c.b16 %v408, %v400
    %v649 = vpack.c.b16 %v409, %v401
    %v650 = vpack.c.b16 %v418, %v410
    %v651 = vpack.c.b16 %v419, %v411
    %v652 = vpack.c.b16 %v420, %v412
    %v653 = vpack.c.b16 %v421, %v413
    %v654 = vpack.c.b16 %v422, %v414
    %v655 = vpack.c.b16 %v423, %v415
    %v656 = vpack.c.b16 %v424, %v416
    %v657 = vpack.c.b16 %v425, %v417
    %v658 = vpack.c.b16 %v434, %v426
    %v659 = vpack.c.b16 %v435, %v427
    %v660 = vpack.c.b16 %v436, %v428
    %v661 = vpack.c.b16 %v437, %v429
    %v662 = vpack.c.b16 %v438, %v430
    %v663 = vpack.c.b16 %v439, %v431
    %v664 = vpack.c.b16 %v440, %v432
    %v665 = vpack.c.b16 %v441, %v433
    %v666 = vpack.c.b16 %v450, %v442
    %v667 = vpack.c.b16 %v451, %v443
    %v668 = vpack.c.b16 %v452, %v444
    %v669 = vpack.c.b16 %v453, %v445
    %v670 = vpack.c.b16 %v454, %v446
    %v671 = vpack.c.b16 %v455, %v447
    %v672 = vpack.c.b16 %v456, %v448
    %v673 = vpack.c.b16 %v457, %v449
    %v674 = vpack.c.b16 %v466, %v458
    %v675 = vpack.c.b16 %v467, %v459
    %v676 = vpack.c.b16 %v468, %v460
    %v677 = vpack.c.b16 %v469, %v461
    %v678 = vpack.c.b16 %v470, %v462
    %v679 = vpack.c.b16 %v471, %v463
    %v680 = vpack.c.b16 %v472, %v464
    %v681 = vpack.c.b16 %v473, %v465
    %v682 = vpack.c.b16 %v482, %v474
    %v683 = vpack.c.b16 %v483, %v475
    %v684 = vpack.c.b16 %v484, %v476
    %v685 = vpack.c.b16 %v485, %v477
    %v686 = vpack.c.b16 %v486, %v478
    %v687 = vpack.c.b16 %v487, %v479
    %v688 = vpack.c.b16 %v488, %v480
    %v689 = vpack.c.b16 %v489, %v481
    %v690 = vpack.c.b16 %v498, %v490
    %v691 = vpack.c.b16 %v499, %v491
    %v692 = vpack.c.b16 %v500, %v492
    %v693 = vpack.c.b16 %v501, %v493
    %v694 = vpack.c.b16 %v502, %v494
    %v695 = vpack.c.b16 %v503, %v495
    %v696 = vpack.c.b16 %v504, %v496
    %v697 = vpack.c.b16 %v505, %v497
    %v698 = vpack.c.b16 %v514, %v506
    %v699 = vpack.c.b16 %v515, %v507
    %v700 = vpack.c.b16 %v516, %v508
    %v701 = vpack.c.b16 %v517, %v509
    %v702 = vpack.c.b16 %v518, %v510
    %v703 = vpack.c.b16 %v519, %v511
    %v704 = vpack.c.b16 %v520, %v512
    %v705 = vpack.c.b16 %v521, %v513
    %v706 = vpack.c.b16 %v530, %v522
    %v707 = vpack.c.b16 %v531, %v523
    %v708 = vpack.c.b16 %v532, %v524
    %v709 = vpack.c.b16 %v533, %v525
    %v710 = vpack.c.b16 %v534, %v526
    %v711 = vpack.c.b16 %v535, %v527
    %v712 = vpack.c.b16 %v536, %v528
    %v713 = vpack.c.b16 %v537, %v529
    %v714 = vpack.c.b16 %v546, %v538
    %v715 = vpack.c.b16 %v547, %v539
    %v716 = vpack.c.b16 %v548, %v540
    %v717 = vpack.c.b16 %v549, %v541
    %v718 = vpack.c.b16 %v550, %v542
    %v719 = vpack.c.b16 %v551, %v543
    %v720 = vpack.c.b16 %v552, %v544
    %v721 = vpack.c.b16 %v553, %v545
    %v722 = vpack.c.b16 %v562, %v554
    %v723 = vpack.c.b16 %v563, %v555
    %v724 = vpack.c.b16 %v564, %v556
    %v725 = vpack.c.b16 %v565, %v557
    %v726 = vpack.c.b16 %v566, %v558
    %v727 = vpack.c.b16 %v567, %v559
    %v728 = vpack.c.b16 %v568, %v560
    %v729 = vpack.c.b16 %v569, %v561
    %v730 = vpack.c.b16 %v578, %v570
    %v731 = vpack.c.b16 %v579, %v571
    %v732 = vpack.c.b16 %v580, %v572
    %v733 = vpack.c.b16 %v581, %v573
    %v734 = vpack.c.b16 %v582, %v574
    %v735 = vpack.c.b16 %v583, %v575
    %v736 = vpack.c.b16 %v584, %v576
    %v737 = vpack.c.b16 %v585, %v577
    %v738 = vpack.c.b16 %v594, %v586
    %v739 = vpack.c.b16 %v595, %v587
    %v740 = vpack.c.b16 %v596, %v588
    %v741 = vpack.c.b16 %v597, %v589
    %v742 = vpack.c.b16 %v598, %v590
    %v743 = vpack.c.b16 %v599, %v591
    %v744 = vpack.c.b16 %v600, %v592
    %v745 = vpack.c.b16 %v601, %v593
    %v746 = vpack.c.b16 %v610, %v602
    %v747 = vpack.c.b16 %v611, %v603
    %v748 = vpack.c.b16 %v612, %v604
    %v749 = vpack.c.b16 %v613, %v605
    %v750 = vpack.c.b16 %v614, %v606
    %v751 = vpack.c.b16 %v615, %v607
    %v752 = vpack.c.b16 %v616, %v608
    %v753 = vpack.c.b16 %v617, %v609
    %v754 = vpack.c.b16 %v626, %v618
    %v755 = vpack.c.b16 %v627, %v619
    %v756 = vpack.c.b16 %v628, %v620
    %v757 = vpack.c.b16 %v629, %v621
    %v758 = vpack.c.b16 %v630, %v622
    %v759 = vpack.c.b16 %v631, %v623
    %v760 = vpack.c.b16 %v632, %v624
    %v761 = vpack.c.b16 %v633, %v625
    %890 = vmatprep.subr.bf16.mxu0 %v635
    %891 = vmatpush1.bf16.msra.mxu0 %v634
    %892 = vmatprep.subr.bf16.mxu0 %v643
    %893 = vmatpush1.bf16.msra.mxu0 %v642
    %894 = vmatprep.subr.bf16.mxu0 %v651
    %895 = vmatpush1.bf16.msra.mxu0 %v650
    %896 = vmatprep.subr.bf16.mxu0 %v659
    %897 = vmatpush1.bf16.msra.mxu0 %v658
    %898 = vmatprep.subr.bf16.mxu0 %v667
    %899 = vmatpush1.bf16.msra.mxu0 %v666
    %900 = vmatprep.subr.bf16.mxu0 %v675
    %901 = vmatpush1.bf16.msra.mxu0 %v674
    %902 = vmatprep.subr.bf16.mxu0 %v683
    %903 = vmatpush1.bf16.msra.mxu0 %v682
    %904 = vmatprep.subr.bf16.mxu0 %v691
    %905 = vmatpush1.bf16.msra.mxu0 %v690
    %906 = vmatprep.subr.bf16.mxu0 %v699
    %907 = vmatpush1.bf16.msra.mxu0 %v698
    %908 = vmatprep.subr.bf16.mxu0 %v707
    %909 = vmatpush1.bf16.msra.mxu0 %v706
    %910 = vmatprep.subr.bf16.mxu0 %v715
    %911 = vmatpush1.bf16.msra.mxu0 %v714
    %912 = vmatprep.subr.bf16.mxu0 %v723
    %913 = vmatpush1.bf16.msra.mxu0 %v722
    %914 = vmatprep.subr.bf16.mxu0 %v731
    %915 = vmatpush1.bf16.msra.mxu0 %v730
    %916 = vmatprep.subr.bf16.mxu0 %v739
    %917 = vmatpush1.bf16.msra.mxu0 %v738
    %918 = vmatprep.subr.bf16.mxu0 %v747
    %919 = vmatpush1.bf16.msra.mxu0 %v746
    %920 = vmatprep.subr.bf16.mxu0 %v755
    %921 = vmatpush1.bf16.msra.mxu0 %v754
    %922 = vmatprep.mubr.bf16.mxu0 %v79
    %923 = vmatmul.mubr.bf16.gmra.mrb[0].mxu0 %v78
    %v924 = vpop.f32.mrb[0].mxu0
    %v925 = vadd.f32 %v213, %v924
    %v926 = vpop.f32.mrb[0].mxu0
    %v927 = vadd.f32 %v217, %v926
    %v928 = vpop.f32.mrb[0].mxu0
    %v929 = vadd.f32 %v213, %v928
    %v930 = vpop.f32.mrb[0].mxu0
    %v931 = vadd.f32 %v217, %v930
    %932 = vdwg.mxu0
    %933 = vmatprep.subr.bf16.mxu0 %v637
    %934 = vmatpush1.bf16.msra.mxu0 %v636
    %935 = vmatprep.subr.bf16.mxu0 %v645
    %936 = vmatpush1.bf16.msra.mxu0 %v644
    %937 = vmatprep.subr.bf16.mxu0 %v653
    %938 = vmatpush1.bf16.msra.mxu0 %v652
    %939 = vmatprep.subr.bf16.mxu0 %v661
    %940 = vmatpush1.bf16.msra.mxu0 %v660
    %941 = vmatprep.subr.bf16.mxu0 %v669
    %942 = vmatpush1.bf16.msra.mxu0 %v668
    %943 = vmatprep.subr.bf16.mxu0 %v677
    %944 = vmatpush1.bf16.msra.mxu0 %v676
    %945 = vmatprep.subr.bf16.mxu0 %v685
    %946 = vmatpush1.bf16.msra.mxu0 %v684
    %947 = vmatprep.subr.bf16.mxu0 %v693
    %948 = vmatpush1.bf16.msra.mxu0 %v692
    %949 = vmatprep.subr.bf16.mxu0 %v701
    %950 = vmatpush1.bf16.msra.mxu0 %v700
    %951 = vmatprep.subr.bf16.mxu0 %v709
    %952 = vmatpush1.bf16.msra.mxu0 %v708
    %953 = vmatprep.subr.bf16.mxu0 %v717
    %954 = vmatpush1.bf16.msra.mxu0 %v716
    %955 = vmatprep.subr.bf16.mxu0 %v725
    %956 = vmatpush1.bf16.msra.mxu0 %v724
    %957 = vmatprep.subr.bf16.mxu0 %v733
    %958 = vmatpush1.bf16.msra.mxu0 %v732
    %959 = vmatprep.subr.bf16.mxu0 %v741
    %960 = vmatpush1.bf16.msra.mxu0 %v740
    %961 = vmatprep.subr.bf16.mxu0 %v749
    %962 = vmatpush1.bf16.msra.mxu0 %v748
    %963 = vmatprep.subr.bf16.mxu0 %v757
    %964 = vmatpush1.bf16.msra.mxu0 %v756
    %965 = vmatprep.mubr.bf16.mxu0 %v79
    %966 = vmatmul.mubr.bf16.gmra.mrb[0].mxu0 %v78
    %v967 = vpop.f32.mrb[0].mxu0
    %v968 = vadd.f32 %v221, %v967
    %v969 = vpop.f32.mrb[0].mxu0
    %v970 = vadd.f32 %v225, %v969
    %v971 = vpop.f32.mrb[0].mxu0
    %v972 = vadd.f32 %v221, %v971
    %v973 = vpop.f32.mrb[0].mxu0
    %v974 = vadd.f32 %v225, %v973
    %975 = vdwg.mxu0
    %976 = vmatprep.subr.bf16.mxu0 %v639
    %977 = vmatpush1.bf16.msra.mxu0 %v638
    %978 = vmatprep.subr.bf16.mxu0 %v647
    %979 = vmatpush1.bf16.msra.mxu0 %v646
    %980 = vmatprep.subr.bf16.mxu0 %v655
    %981 = vmatpush1.bf16.msra.mxu0 %v654
    %982 = vmatprep.subr.bf16.mxu0 %v663
    %983 = vmatpush1.bf16.msra.mxu0 %v662
    %984 = vmatprep.subr.bf16.mxu0 %v671
    %985 = vmatpush1.bf16.msra.mxu0 %v670
    %986 = vmatprep.subr.bf16.mxu0 %v679
    %987 = vmatpush1.bf16.msra.mxu0 %v678
    %988 = vmatprep.subr.bf16.mxu0 %v687
    %989 = vmatpush1.bf16.msra.mxu0 %v686
    %990 = vmatprep.subr.bf16.mxu0 %v695
    %991 = vmatpush1.bf16.msra.mxu0 %v694
    %992 = vmatprep.subr.bf16.mxu0 %v703
    %993 = vmatpush1.bf16.msra.mxu0 %v702
    %994 = vmatprep.subr.bf16.mxu0 %v711
    %995 = vmatpush1.bf16.msra.mxu0 %v710
    %996 = vmatprep.subr.bf16.mxu0 %v719
    %997 = vmatpush1.bf16.msra.mxu0 %v718
    %998 = vmatprep.subr.bf16.mxu0 %v727
    %999 = vmatpush1.bf16.msra.mxu0 %v726
    %1000 = vmatprep.subr.bf16.mxu0 %v735
    %1001 = vmatpush1.bf16.msra.mxu0 %v734
    %1002 = vmatprep.subr.bf16.mxu0 %v743
    %1003 = vmatpush1.bf16.msra.mxu0 %v742
    %1004 = vmatprep.subr.bf16.mxu0 %v751
    %1005 = vmatpush1.bf16.msra.mxu0 %v750
    %1006 = vmatprep.subr.bf16.mxu0 %v759
    %1007 = vmatpush1.bf16.msra.mxu0 %v758
    %1008 = vmatprep.mubr.bf16.mxu0 %v79
    %1009 = vmatmul.mubr.bf16.gmra.mrb[0].mxu0 %v78
    %v1010 = vpop.f32.mrb[0].mxu0
    %v1011 = vadd.f32 %v229, %v1010
    %v1012 = vpop.f32.mrb[0].mxu0
    %v1013 = vadd.f32 %v233, %v1012
    %v1014 = vpop.f32.mrb[0].mxu0
    %v1015 = vadd.f32 %v229, %v1014
    %v1016 = vpop.f32.mrb[0].mxu0
    %v1017 = vadd.f32 %v233, %v1016
    %1018 = vdwg.mxu0
    %1019 = vmatprep.subr.bf16.mxu0 %v641
    %1020 = vmatpush1.bf16.msra.mxu0 %v640
    %1021 = vmatprep.subr.bf16.mxu0 %v649
    %1022 = vmatpush1.bf16.msra.mxu0 %v648
    %1023 = vmatprep.subr.bf16.mxu0 %v657
    %1024 = vmatpush1.bf16.msra.mxu0 %v656
    %1025 = vmatprep.subr.bf16.mxu0 %v665
    %1026 = vmatpush1.bf16.msra.mxu0 %v664
    %1027 = vmatprep.subr.bf16.mxu0 %v673
    %1028 = vmatpush1.bf16.msra.mxu0 %v672
    %1029 = vmatprep.subr.bf16.mxu0 %v681
    %1030 = vmatpush1.bf16.msra.mxu0 %v680
    %1031 = vmatprep.subr.bf16.mxu0 %v689
    %1032 = vmatpush1.bf16.msra.mxu0 %v688
    %1033 = vmatprep.subr.bf16.mxu0 %v697
    %1034 = vmatpush1.bf16.msra.mxu0 %v696
    %1035 = vmatprep.subr.bf16.mxu0 %v705
    %1036 = vmatpush1.bf16.msra.mxu0 %v704
    %1037 = vmatprep.subr.bf16.mxu0 %v713
    %1038 = vmatpush1.bf16.msra.mxu0 %v712
    %1039 = vmatprep.subr.bf16.mxu0 %v721
    %1040 = vmatpush1.bf16.msra.mxu0 %v720
    %1041 = vmatprep.subr.bf16.mxu0 %v729
    %1042 = vmatpush1.bf16.msra.mxu0 %v728
    %1043 = vmatprep.subr.bf16.mxu0 %v737
    %1044 = vmatpush1.bf16.msra.mxu0 %v736
    %1045 = vmatprep.subr.bf16.mxu0 %v745
    %1046 = vmatpush1.bf16.msra.mxu0 %v744
    %1047 = vmatprep.subr.bf16.mxu0 %v753
    %1048 = vmatpush1.bf16.msra.mxu0 %v752
    %1049 = vmatprep.subr.bf16.mxu0 %v761
    %1050 = vmatpush1.bf16.msra.mxu0 %v760
    %1051 = vmatprep.mubr.bf16.mxu0 %v79
    %1052 = vmatmul.mubr.bf16.gmra.mrb[0].mxu0 %v78
    %v1053 = vpop.f32.mrb[0].mxu0
    %v1054 = vadd.f32 %v237, %v1053
    %v1055 = vpop.f32.mrb[0].mxu0
    %v1056 = vadd.f32 %v241, %v1055
    %v1057 = vpop.f32.mrb[0].mxu0
    %v1058 = vadd.f32 %v237, %v1057
    %v1059 = vpop.f32.mrb[0].mxu0
    %v1060 = vadd.f32 %v241, %v1059
    %1061 = vdwg.mxu0
    %v1062 = vmax.f32 %v925, 0.0
    %v1063 = vmax.f32 %v927, 0.0
    %v1064 = vmax.f32 %v968, 0.0
    %v1065 = vmax.f32 %v970, 0.0
    %v1066 = vmax.f32 %v1011, 0.0
    %v1067 = vmax.f32 %v1013, 0.0
    %v1068 = vmax.f32 %v1054, 0.0
    %v1069 = vmax.f32 %v1056, 0.0
    %v1070 = vmax.f32 %v929, 0.0
    %v1071 = vmax.f32 %v931, 0.0
    %v1072 = vmax.f32 %v972, 0.0
    %v1073 = vmax.f32 %v974, 0.0
    %v1074 = vmax.f32 %v1015, 0.0
    %v1075 = vmax.f32 %v1017, 0.0
    %v1076 = vmax.f32 %v1058, 0.0
    %v1077 = vmax.f32 %v1060, 0.0
    %v1078 = vpack.c.bf16 %v1070, %v1062
    %v1079 = vpack.c.bf16 %v1071, %v1063
    %v1080 = vpack.c.bf16 %v1072, %v1064
    %v1081 = vpack.c.bf16 %v1073, %v1065
    %v1082 = vpack.c.bf16 %v1074, %v1066
    %v1083 = vpack.c.bf16 %v1075, %v1067
    %v1084 = vpack.c.bf16 %v1076, %v1068
    %v1085 = vpack.c.bf16 %v1077, %v1069
    %v1086 = vld [vmem:[#allocation8] sm:$0xff]
    %v1087 = vld [vmem:[#allocation8 + $0x8] sm:$0xff]
    %v1088 = vld [vmem:[#allocation8 + $0x10] sm:$0xff]
    %v1089 = vld [vmem:[#allocation8 + $0x18] sm:$0xff]
    %v1090 = vld [vmem:[#allocation8 + $0x20] sm:$0xff]
    %v1091 = vld [vmem:[#allocation8 + $0x28] sm:$0xff]
    %v1092 = vld [vmem:[#allocation8 + $0x30] sm:$0xff]
    %v1093 = vld [vmem:[#allocation8 + $0x38] sm:$0xff]
    %v1094 = vld [vmem:[#allocation8 + $0x40] sm:$0xff]
    %v1095 = vld [vmem:[#allocation8 + $0x48] sm:$0xff]
    %v1096 = vld [vmem:[#allocation8 + $0x50] sm:$0xff]
    %v1097 = vld [vmem:[#allocation8 + $0x58] sm:$0xff]
    %v1098 = vld [vmem:[#allocation8 + $0x60] sm:$0xff]
    %v1099 = vld [vmem:[#allocation8 + $0x68] sm:$0xff]
    %v1100 = vld [vmem:[#allocation8 + $0x70] sm:$0xff]
    %v1101 = vld [vmem:[#allocation8 + $0x78] sm:$0xff]
    %v1102 = vld [vmem:[#allocation8 + $0x80] sm:$0xff]
    %v1103 = vld [vmem:[#allocation8 + $0x88] sm:$0xff]
    %v1104 = vld [vmem:[#allocation8 + $0x90] sm:$0xff]
    %v1105 = vld [vmem:[#allocation8 + $0x98] sm:$0xff]
    %v1106 = vld [vmem:[#allocation8 + $0xa0] sm:$0xff]
    %v1107 = vld [vmem:[#allocation8 + $0xa8] sm:$0xff]
    %v1108 = vld [vmem:[#allocation8 + $0xb0] sm:$0xff]
    %v1109 = vld [vmem:[#allocation8 + $0xb8] sm:$0xff]
    %v1110 = vld [vmem:[#allocation8 + $0xc0] sm:$0xff]
    %v1111 = vld [vmem:[#allocation8 + $0xc8] sm:$0xff]
    %v1112 = vld [vmem:[#allocation8 + $0xd0] sm:$0xff]
    %v1113 = vld [vmem:[#allocation8 + $0xd8] sm:$0xff]
    %v1114 = vld [vmem:[#allocation8 + $0xe0] sm:$0xff]
    %v1115 = vld [vmem:[#allocation8 + $0xe8] sm:$0xff]
    %v1116 = vld [vmem:[#allocation8 + $0xf0] sm:$0xff]
    %v1117 = vld [vmem:[#allocation8 + $0xf8] sm:$0xff]
    %v1118 = vld [vmem:[#allocation8 + $0x100] sm:$0xff]
    %v1119 = vld [vmem:[#allocation8 + $0x108] sm:$0xff]
    %v1120 = vld [vmem:[#allocation8 + $0x110] sm:$0xff]
    %v1121 = vld [vmem:[#allocation8 + $0x118] sm:$0xff]
    %v1122 = vld [vmem:[#allocation8 + $0x120] sm:$0xff]
    %v1123 = vld [vmem:[#allocation8 + $0x128] sm:$0xff]
    %v1124 = vld [vmem:[#allocation8 + $0x130] sm:$0xff]
    %v1125 = vld [vmem:[#allocation8 + $0x138] sm:$0xff]
    %v1126 = vld [vmem:[#allocation8 + $0x140] sm:$0xff]
    %v1127 = vld [vmem:[#allocation8 + $0x148] sm:$0xff]
    %v1128 = vld [vmem:[#allocation8 + $0x150] sm:$0xff]
    %v1129 = vld [vmem:[#allocation8 + $0x158] sm:$0xff]
    %v1130 = vld [vmem:[#allocation8 + $0x160] sm:$0xff]
    %v1131 = vld [vmem:[#allocation8 + $0x168] sm:$0xff]
    %v1132 = vld [vmem:[#allocation8 + $0x170] sm:$0xff]
    %v1133 = vld [vmem:[#allocation8 + $0x178] sm:$0xff]
    %v1134 = vld [vmem:[#allocation8 + $0x180] sm:$0xff]
    %v1135 = vld [vmem:[#allocation8 + $0x188] sm:$0xff]
    %v1136 = vld [vmem:[#allocation8 + $0x190] sm:$0xff]
    %v1137 = vld [vmem:[#allocation8 + $0x198] sm:$0xff]
    %v1138 = vld [vmem:[#allocation8 + $0x1a0] sm:$0xff]
    %v1139 = vld [vmem:[#allocation8 + $0x1a8] sm:$0xff]
    %v1140 = vld [vmem:[#allocation8 + $0x1b0] sm:$0xff]
    %v1141 = vld [vmem:[#allocation8 + $0x1b8] sm:$0xff]
    %v1142 = vld [vmem:[#allocation8 + $0x1c0] sm:$0xff]
    %v1143 = vld [vmem:[#allocation8 + $0x1c8] sm:$0xff]
    %v1144 = vld [vmem:[#allocation8 + $0x1d0] sm:$0xff]
    %v1145 = vld [vmem:[#allocation8 + $0x1d8] sm:$0xff]
    %v1146 = vld [vmem:[#allocation8 + $0x1e0] sm:$0xff]
    %v1147 = vld [vmem:[#allocation8 + $0x1e8] sm:$0xff]
    %v1148 = vld [vmem:[#allocation8 + $0x1f0] sm:$0xff]
    %v1149 = vld [vmem:[#allocation8 + $0x1f8] sm:$0xff]
    %v1150 = vld [vmem:[#allocation8 + $0x200] sm:$0xff]
    %v1151 = vld [vmem:[#allocation8 + $0x208] sm:$0xff]
    %v1152 = vld [vmem:[#allocation8 + $0x210] sm:$0xff]
    %v1153 = vld [vmem:[#allocation8 + $0x218] sm:$0xff]
    %v1154 = vld [vmem:[#allocation8 + $0x220] sm:$0xff]
    %v1155 = vld [vmem:[#allocation8 + $0x228] sm:$0xff]
    %v1156 = vld [vmem:[#allocation8 + $0x230] sm:$0xff]
    %v1157 = vld [vmem:[#allocation8 + $0x238] sm:$0xff]
    %v1158 = vld [vmem:[#allocation8 + $0x240] sm:$0xff]
    %v1159 = vld [vmem:[#allocation8 + $0x248] sm:$0xff]
    %v1160 = vld [vmem:[#allocation8 + $0x250] sm:$0xff]
    %v1161 = vld [vmem:[#allocation8 + $0x258] sm:$0xff]
    %v1162 = vld [vmem:[#allocation8 + $0x260] sm:$0xff]
    %v1163 = vld [vmem:[#allocation8 + $0x268] sm:$0xff]
    %v1164 = vld [vmem:[#allocation8 + $0x270] sm:$0xff]
    %v1165 = vld [vmem:[#allocation8 + $0x278] sm:$0xff]
    %v1166 = vld [vmem:[#allocation8 + $0x280] sm:$0xff]
    %v1167 = vld [vmem:[#allocation8 + $0x288] sm:$0xff]
    %v1168 = vld [vmem:[#allocation8 + $0x290] sm:$0xff]
    %v1169 = vld [vmem:[#allocation8 + $0x298] sm:$0xff]
    %v1170 = vld [vmem:[#allocation8 + $0x2a0] sm:$0xff]
    %v1171 = vld [vmem:[#allocation8 + $0x2a8] sm:$0xff]
    %v1172 = vld [vmem:[#allocation8 + $0x2b0] sm:$0xff]
    %v1173 = vld [vmem:[#allocation8 + $0x2b8] sm:$0xff]
    %v1174 = vld [vmem:[#allocation8 + $0x2c0] sm:$0xff]
    %v1175 = vld [vmem:[#allocation8 + $0x2c8] sm:$0xff]
    %v1176 = vld [vmem:[#allocation8 + $0x2d0] sm:$0xff]
    %v1177 = vld [vmem:[#allocation8 + $0x2d8] sm:$0xff]
    %v1178 = vld [vmem:[#allocation8 + $0x2e0] sm:$0xff]
    %v1179 = vld [vmem:[#allocation8 + $0x2e8] sm:$0xff]
    %v1180 = vld [vmem:[#allocation8 + $0x2f0] sm:$0xff]
    %v1181 = vld [vmem:[#allocation8 + $0x2f8] sm:$0xff]
    %v1182 = vld [vmem:[#allocation8 + $0x300] sm:$0xff]
    %v1183 = vld [vmem:[#allocation8 + $0x308] sm:$0xff]
    %v1184 = vld [vmem:[#allocation8 + $0x310] sm:$0xff]
    %v1185 = vld [vmem:[#allocation8 + $0x318] sm:$0xff]
    %v1186 = vld [vmem:[#allocation8 + $0x320] sm:$0xff]
    %v1187 = vld [vmem:[#allocation8 + $0x328] sm:$0xff]
    %v1188 = vld [vmem:[#allocation8 + $0x330] sm:$0xff]
    %v1189 = vld [vmem:[#allocation8 + $0x338] sm:$0xff]
    %v1190 = vld [vmem:[#allocation8 + $0x340] sm:$0xff]
    %v1191 = vld [vmem:[#allocation8 + $0x348] sm:$0xff]
    %v1192 = vld [vmem:[#allocation8 + $0x350] sm:$0xff]
    %v1193 = vld [vmem:[#allocation8 + $0x358] sm:$0xff]
    %v1194 = vld [vmem:[#allocation8 + $0x360] sm:$0xff]
    %v1195 = vld [vmem:[#allocation8 + $0x368] sm:$0xff]
    %v1196 = vld [vmem:[#allocation8 + $0x370] sm:$0xff]
    %v1197 = vld [vmem:[#allocation8 + $0x378] sm:$0xff]
    %v1198 = vld [vmem:[#allocation8 + $0x380] sm:$0xff]
    %v1199 = vld [vmem:[#allocation8 + $0x388] sm:$0xff]
    %v1200 = vld [vmem:[#allocation8 + $0x390] sm:$0xff]
    %v1201 = vld [vmem:[#allocation8 + $0x398] sm:$0xff]
    %v1202 = vld [vmem:[#allocation8 + $0x3a0] sm:$0xff]
    %v1203 = vld [vmem:[#allocation8 + $0x3a8] sm:$0xff]
    %v1204 = vld [vmem:[#allocation8 + $0x3b0] sm:$0xff]
    %v1205 = vld [vmem:[#allocation8 + $0x3b8] sm:$0xff]
    %v1206 = vld [vmem:[#allocation8 + $0x3c0] sm:$0xff]
    %v1207 = vld [vmem:[#allocation8 + $0x3c8] sm:$0xff]
    %v1208 = vld [vmem:[#allocation8 + $0x3d0] sm:$0xff]
    %v1209 = vld [vmem:[#allocation8 + $0x3d8] sm:$0xff]
    %v1210 = vld [vmem:[#allocation8 + $0x3e0] sm:$0xff]
    %v1211 = vld [vmem:[#allocation8 + $0x3e8] sm:$0xff]
    %v1212 = vld [vmem:[#allocation8 + $0x3f0] sm:$0xff]
    %v1213 = vld [vmem:[#allocation8 + $0x3f8] sm:$0xff]
    %v1214 = vld [vmem:[%s4] sm:$0x3]
    %v1216 = vlaneseq
    %v1217 = vshrl.u32 %v1216, 7
    %v1218 = vsub.s32 0, %v1217
    %v1219 = vrot.slane %v1214, %v1218
    %v1220 = vlaneseq
    %v1221 = vshrl.u32 %v1220, 7
    %v1222 = vsub.s32 1, %v1221
    %v1223 = vrot.slane %v1214, %v1222
    %v1354 = vunpack.c.l.b16 %v1086
    %v1355 = vunpack.c.h.b16 %v1086
    %v1356 = vunpack.c.l.b16 %v1087
    %v1357 = vunpack.c.h.b16 %v1087
    %v1358 = vunpack.c.l.b16 %v1088
    %v1359 = vunpack.c.h.b16 %v1088
    %v1360 = vunpack.c.l.b16 %v1089
    %v1361 = vunpack.c.h.b16 %v1089
    %v1362 = vunpack.c.l.b16 %v1090
    %v1363 = vunpack.c.h.b16 %v1090
    %v1364 = vunpack.c.l.b16 %v1091
    %v1365 = vunpack.c.h.b16 %v1091
    %v1366 = vunpack.c.l.b16 %v1092
    %v1367 = vunpack.c.h.b16 %v1092
    %v1368 = vunpack.c.l.b16 %v1093
    %v1369 = vunpack.c.h.b16 %v1093
    %v1370 = vunpack.c.l.b16 %v1094
    %v1371 = vunpack.c.h.b16 %v1094
    %v1372 = vunpack.c.l.b16 %v1095
    %v1373 = vunpack.c.h.b16 %v1095
    %v1374 = vunpack.c.l.b16 %v1096
    %v1375 = vunpack.c.h.b16 %v1096
    %v1376 = vunpack.c.l.b16 %v1097
    %v1377 = vunpack.c.h.b16 %v1097
    %v1378 = vunpack.c.l.b16 %v1098
    %v1379 = vunpack.c.h.b16 %v1098
    %v1380 = vunpack.c.l.b16 %v1099
    %v1381 = vunpack.c.h.b16 %v1099
    %v1382 = vunpack.c.l.b16 %v1100
    %v1383 = vunpack.c.h.b16 %v1100
    %v1384 = vunpack.c.l.b16 %v1101
    %v1385 = vunpack.c.h.b16 %v1101
    %v1386 = vunpack.c.l.b16 %v1102
    %v1387 = vunpack.c.h.b16 %v1102
    %v1388 = vunpack.c.l.b16 %v1103
    %v1389 = vunpack.c.h.b16 %v1103
    %v1390 = vunpack.c.l.b16 %v1104
    %v1391 = vunpack.c.h.b16 %v1104
    %v1392 = vunpack.c.l.b16 %v1105
    %v1393 = vunpack.c.h.b16 %v1105
    %v1394 = vunpack.c.l.b16 %v1106
    %v1395 = vunpack.c.h.b16 %v1106
    %v1396 = vunpack.c.l.b16 %v1107
    %v1397 = vunpack.c.h.b16 %v1107
    %v1398 = vunpack.c.l.b16 %v1108
    %v1399 = vunpack.c.h.b16 %v1108
    %v1400 = vunpack.c.l.b16 %v1109
    %v1401 = vunpack.c.h.b16 %v1109
    %v1402 = vunpack.c.l.b16 %v1110
    %v1403 = vunpack.c.h.b16 %v1110
    %v1404 = vunpack.c.l.b16 %v1111
    %v1405 = vunpack.c.h.b16 %v1111
    %v1406 = vunpack.c.l.b16 %v1112
    %v1407 = vunpack.c.h.b16 %v1112
    %v1408 = vunpack.c.l.b16 %v1113
    %v1409 = vunpack.c.h.b16 %v1113
    %v1410 = vunpack.c.l.b16 %v1114
    %v1411 = vunpack.c.h.b16 %v1114
    %v1412 = vunpack.c.l.b16 %v1115
    %v1413 = vunpack.c.h.b16 %v1115
    %v1414 = vunpack.c.l.b16 %v1116
    %v1415 = vunpack.c.h.b16 %v1116
    %v1416 = vunpack.c.l.b16 %v1117
    %v1417 = vunpack.c.h.b16 %v1117
    %v1418 = vunpack.c.l.b16 %v1118
    %v1419 = vunpack.c.h.b16 %v1118
    %v1420 = vunpack.c.l.b16 %v1119
    %v1421 = vunpack.c.h.b16 %v1119
    %v1422 = vunpack.c.l.b16 %v1120
    %v1423 = vunpack.c.h.b16 %v1120
    %v1424 = vunpack.c.l.b16 %v1121
    %v1425 = vunpack.c.h.b16 %v1121
    %v1426 = vunpack.c.l.b16 %v1122
    %v1427 = vunpack.c.h.b16 %v1122
    %v1428 = vunpack.c.l.b16 %v1123
    %v1429 = vunpack.c.h.b16 %v1123
    %v1430 = vunpack.c.l.b16 %v1124
    %v1431 = vunpack.c.h.b16 %v1124
    %v1432 = vunpack.c.l.b16 %v1125
    %v1433 = vunpack.c.h.b16 %v1125
    %v1434 = vunpack.c.l.b16 %v1126
    %v1435 = vunpack.c.h.b16 %v1126
    %v1436 = vunpack.c.l.b16 %v1127
    %v1437 = vunpack.c.h.b16 %v1127
    %v1438 = vunpack.c.l.b16 %v1128
    %v1439 = vunpack.c.h.b16 %v1128
    %v1440 = vunpack.c.l.b16 %v1129
    %v1441 = vunpack.c.h.b16 %v1129
    %v1442 = vunpack.c.l.b16 %v1130
    %v1443 = vunpack.c.h.b16 %v1130
    %v1444 = vunpack.c.l.b16 %v1131
    %v1445 = vunpack.c.h.b16 %v1131
    %v1446 = vunpack.c.l.b16 %v1132
    %v1447 = vunpack.c.h.b16 %v1132
    %v1448 = vunpack.c.l.b16 %v1133
    %v1449 = vunpack.c.h.b16 %v1133
    %v1450 = vunpack.c.l.b16 %v1134
    %v1451 = vunpack.c.h.b16 %v1134
    %v1452 = vunpack.c.l.b16 %v1135
    %v1453 = vunpack.c.h.b16 %v1135
    %v1454 = vunpack.c.l.b16 %v1136
    %v1455 = vunpack.c.h.b16 %v1136
    %v1456 = vunpack.c.l.b16 %v1137
    %v1457 = vunpack.c.h.b16 %v1137
    %v1458 = vunpack.c.l.b16 %v1138
    %v1459 = vunpack.c.h.b16 %v1138
    %v1460 = vunpack.c.l.b16 %v1139
    %v1461 = vunpack.c.h.b16 %v1139
    %v1462 = vunpack.c.l.b16 %v1140
    %v1463 = vunpack.c.h.b16 %v1140
    %v1464 = vunpack.c.l.b16 %v1141
    %v1465 = vunpack.c.h.b16 %v1141
    %v1466 = vunpack.c.l.b16 %v1142
    %v1467 = vunpack.c.h.b16 %v1142
    %v1468 = vunpack.c.l.b16 %v1143
    %v1469 = vunpack.c.h.b16 %v1143
    %v1470 = vunpack.c.l.b16 %v1144
    %v1471 = vunpack.c.h.b16 %v1144
    %v1472 = vunpack.c.l.b16 %v1145
    %v1473 = vunpack.c.h.b16 %v1145
    %v1474 = vunpack.c.l.b16 %v1146
    %v1475 = vunpack.c.h.b16 %v1146
    %v1476 = vunpack.c.l.b16 %v1147
    %v1477 = vunpack.c.h.b16 %v1147
    %v1478 = vunpack.c.l.b16 %v1148
    %v1479 = vunpack.c.h.b16 %v1148
    %v1480 = vunpack.c.l.b16 %v1149
    %v1481 = vunpack.c.h.b16 %v1149
    %v1482 = vunpack.c.l.b16 %v1150
    %v1483 = vunpack.c.h.b16 %v1150
    %v1484 = vunpack.c.l.b16 %v1151
    %v1485 = vunpack.c.h.b16 %v1151
    %v1486 = vunpack.c.l.b16 %v1152
    %v1487 = vunpack.c.h.b16 %v1152
    %v1488 = vunpack.c.l.b16 %v1153
    %v1489 = vunpack.c.h.b16 %v1153
    %v1490 = vunpack.c.l.b16 %v1154
    %v1491 = vunpack.c.h.b16 %v1154
    %v1492 = vunpack.c.l.b16 %v1155
    %v1493 = vunpack.c.h.b16 %v1155
    %v1494 = vunpack.c.l.b16 %v1156
    %v1495 = vunpack.c.h.b16 %v1156
    %v1496 = vunpack.c.l.b16 %v1157
    %v1497 = vunpack.c.h.b16 %v1157
    %v1498 = vunpack.c.l.b16 %v1158
    %v1499 = vunpack.c.h.b16 %v1158
    %v1500 = vunpack.c.l.b16 %v1159
    %v1501 = vunpack.c.h.b16 %v1159
    %v1502 = vunpack.c.l.b16 %v1160
    %v1503 = vunpack.c.h.b16 %v1160
    %v1504 = vunpack.c.l.b16 %v1161
    %v1505 = vunpack.c.h.b16 %v1161
    %v1506 = vunpack.c.l.b16 %v1162
    %v1507 = vunpack.c.h.b16 %v1162
    %v1508 = vunpack.c.l.b16 %v1163
    %v1509 = vunpack.c.h.b16 %v1163
    %v1510 = vunpack.c.l.b16 %v1164
    %v1511 = vunpack.c.h.b16 %v1164
    %v1512 = vunpack.c.l.b16 %v1165
    %v1513 = vunpack.c.h.b16 %v1165
    %v1514 = vunpack.c.l.b16 %v1166
    %v1515 = vunpack.c.h.b16 %v1166
    %v1516 = vunpack.c.l.b16 %v1167
    %v1517 = vunpack.c.h.b16 %v1167
    %v1518 = vunpack.c.l.b16 %v1168
    %v1519 = vunpack.c.h.b16 %v1168
    %v1520 = vunpack.c.l.b16 %v1169
    %v1521 = vunpack.c.h.b16 %v1169
    %v1522 = vunpack.c.l.b16 %v1170
    %v1523 = vunpack.c.h.b16 %v1170
    %v1524 = vunpack.c.l.b16 %v1171
    %v1525 = vunpack.c.h.b16 %v1171
    %v1526 = vunpack.c.l.b16 %v1172
    %v1527 = vunpack.c.h.b16 %v1172
    %v1528 = vunpack.c.l.b16 %v1173
    %v1529 = vunpack.c.h.b16 %v1173
    %v1530 = vunpack.c.l.b16 %v1174
    %v1531 = vunpack.c.h.b16 %v1174
    %v1532 = vunpack.c.l.b16 %v1175
    %v1533 = vunpack.c.h.b16 %v1175
    %v1534 = vunpack.c.l.b16 %v1176
    %v1535 = vunpack.c.h.b16 %v1176
    %v1536 = vunpack.c.l.b16 %v1177
    %v1537 = vunpack.c.h.b16 %v1177
    %v1538 = vunpack.c.l.b16 %v1178
    %v1539 = vunpack.c.h.b16 %v1178
    %v1540 = vunpack.c.l.b16 %v1179
    %v1541 = vunpack.c.h.b16 %v1179
    %v1542 = vunpack.c.l.b16 %v1180
    %v1543 = vunpack.c.h.b16 %v1180
    %v1544 = vunpack.c.l.b16 %v1181
    %v1545 = vunpack.c.h.b16 %v1181
    %v1546 = vunpack.c.l.b16 %v1182
    %v1547 = vunpack.c.h.b16 %v1182
    %v1548 = vunpack.c.l.b16 %v1183
    %v1549 = vunpack.c.h.b16 %v1183
    %v1550 = vunpack.c.l.b16 %v1184
    %v1551 = vunpack.c.h.b16 %v1184
    %v1552 = vunpack.c.l.b16 %v1185
    %v1553 = vunpack.c.h.b16 %v1185
    %v1554 = vunpack.c.l.b16 %v1186
    %v1555 = vunpack.c.h.b16 %v1186
    %v1556 = vunpack.c.l.b16 %v1187
    %v1557 = vunpack.c.h.b16 %v1187
    %v1558 = vunpack.c.l.b16 %v1188
    %v1559 = vunpack.c.h.b16 %v1188
    %v1560 = vunpack.c.l.b16 %v1189
    %v1561 = vunpack.c.h.b16 %v1189
    %v1562 = vunpack.c.l.b16 %v1190
    %v1563 = vunpack.c.h.b16 %v1190
    %v1564 = vunpack.c.l.b16 %v1191
    %v1565 = vunpack.c.h.b16 %v1191
    %v1566 = vunpack.c.l.b16 %v1192
    %v1567 = vunpack.c.h.b16 %v1192
    %v1568 = vunpack.c.l.b16 %v1193
    %v1569 = vunpack.c.h.b16 %v1193
    %v1570 = vunpack.c.l.b16 %v1194
    %v1571 = vunpack.c.h.b16 %v1194
    %v1572 = vunpack.c.l.b16 %v1195
    %v1573 = vunpack.c.h.b16 %v1195
    %v1574 = vunpack.c.l.b16 %v1196
    %v1575 = vunpack.c.h.b16 %v1196
    %v1576 = vunpack.c.l.b16 %v1197
    %v1577 = vunpack.c.h.b16 %v1197
    %v1578 = vunpack.c.l.b16 %v1198
    %v1579 = vunpack.c.h.b16 %v1198
    %v1580 = vunpack.c.l.b16 %v1199
    %v1581 = vunpack.c.h.b16 %v1199
    %v1582 = vunpack.c.l.b16 %v1200
    %v1583 = vunpack.c.h.b16 %v1200
    %v1584 = vunpack.c.l.b16 %v1201
    %v1585 = vunpack.c.h.b16 %v1201
    %v1586 = vunpack.c.l.b16 %v1202
    %v1587 = vunpack.c.h.b16 %v1202
    %v1588 = vunpack.c.l.b16 %v1203
    %v1589 = vunpack.c.h.b16 %v1203
    %v1590 = vunpack.c.l.b16 %v1204
    %v1591 = vunpack.c.h.b16 %v1204
    %v1592 = vunpack.c.l.b16 %v1205
    %v1593 = vunpack.c.h.b16 %v1205
    %v1594 = vunpack.c.l.b16 %v1206
    %v1595 = vunpack.c.h.b16 %v1206
    %v1596 = vunpack.c.l.b16 %v1207
    %v1597 = vunpack.c.h.b16 %v1207
    %v1598 = vunpack.c.l.b16 %v1208
    %v1599 = vunpack.c.h.b16 %v1208
    %v1600 = vunpack.c.l.b16 %v1209
    %v1601 = vunpack.c.h.b16 %v1209
    %v1602 = vunpack.c.l.b16 %v1210
    %v1603 = vunpack.c.h.b16 %v1210
    %v1604 = vunpack.c.l.b16 %v1211
    %v1605 = vunpack.c.h.b16 %v1211
    %v1606 = vunpack.c.l.b16 %v1212
    %v1607 = vunpack.c.h.b16 %v1212
    %v1608 = vunpack.c.l.b16 %v1213
    %v1609 = vunpack.c.h.b16 %v1213
    %v1610 = vpack.c.b16 %v1356, %v1354
    %v1611 = vpack.c.b16 %v1357, %v1355
    %v1612 = vpack.c.b16 %v1360, %v1358
    %v1613 = vpack.c.b16 %v1361, %v1359
    %v1614 = vpack.c.b16 %v1364, %v1362
    %v1615 = vpack.c.b16 %v1365, %v1363
    %v1616 = vpack.c.b16 %v1368, %v1366
    %v1617 = vpack.c.b16 %v1369, %v1367
    %v1618 = vpack.c.b16 %v1372, %v1370
    %v1619 = vpack.c.b16 %v1373, %v1371
    %v1620 = vpack.c.b16 %v1376, %v1374
    %v1621 = vpack.c.b16 %v1377, %v1375
    %v1622 = vpack.c.b16 %v1380, %v1378
    %v1623 = vpack.c.b16 %v1381, %v1379
    %v1624 = vpack.c.b16 %v1384, %v1382
    %v1625 = vpack.c.b16 %v1385, %v1383
    %v1626 = vpack.c.b16 %v1388, %v1386
    %v1627 = vpack.c.b16 %v1389, %v1387
    %v1628 = vpack.c.b16 %v1392, %v1390
    %v1629 = vpack.c.b16 %v1393, %v1391
    %v1630 = vpack.c.b16 %v1396, %v1394
    %v1631 = vpack.c.b16 %v1397, %v1395
    %v1632 = vpack.c.b16 %v1400, %v1398
    %v1633 = vpack.c.b16 %v1401, %v1399
    %v1634 = vpack.c.b16 %v1404, %v1402
    %v1635 = vpack.c.b16 %v1405, %v1403
    %v1636 = vpack.c.b16 %v1408, %v1406
    %v1637 = vpack.c.b16 %v1409, %v1407
    %v1638 = vpack.c.b16 %v1412, %v1410
    %v1639 = vpack.c.b16 %v1413, %v1411
    %v1640 = vpack.c.b16 %v1416, %v1414
    %v1641 = vpack.c.b16 %v1417, %v1415
    %v1642 = vpack.c.b16 %v1420, %v1418
    %v1643 = vpack.c.b16 %v1421, %v1419
    %v1644 = vpack.c.b16 %v1424, %v1422
    %v1645 = vpack.c.b16 %v1425, %v1423
    %v1646 = vpack.c.b16 %v1428, %v1426
    %v1647 = vpack.c.b16 %v1429, %v1427
    %v1648 = vpack.c.b16 %v1432, %v1430
    %v1649 = vpack.c.b16 %v1433, %v1431
    %v1650 = vpack.c.b16 %v1436, %v1434
    %v1651 = vpack.c.b16 %v1437, %v1435
    %v1652 = vpack.c.b16 %v1440, %v1438
    %v1653 = vpack.c.b16 %v1441, %v1439
    %v1654 = vpack.c.b16 %v1444, %v1442
    %v1655 = vpack.c.b16 %v1445, %v1443
    %v1656 = vpack.c.b16 %v1448, %v1446
    %v1657 = vpack.c.b16 %v1449, %v1447
    %v1658 = vpack.c.b16 %v1452, %v1450
    %v1659 = vpack.c.b16 %v1453, %v1451
    %v1660 = vpack.c.b16 %v1456, %v1454
    %v1661 = vpack.c.b16 %v1457, %v1455
    %v1662 = vpack.c.b16 %v1460, %v1458
    %v1663 = vpack.c.b16 %v1461, %v1459
    %v1664 = vpack.c.b16 %v1464, %v1462
    %v1665 = vpack.c.b16 %v1465, %v1463
    %v1666 = vpack.c.b16 %v1468, %v1466
    %v1667 = vpack.c.b16 %v1469, %v1467
    %v1668 = vpack.c.b16 %v1472, %v1470
    %v1669 = vpack.c.b16 %v1473, %v1471
    %v1670 = vpack.c.b16 %v1476, %v1474
    %v1671 = vpack.c.b16 %v1477, %v1475
    %v1672 = vpack.c.b16 %v1480, %v1478
    %v1673 = vpack.c.b16 %v1481, %v1479
    %v1674 = vpack.c.b16 %v1484, %v1482
    %v1675 = vpack.c.b16 %v1485, %v1483
    %v1676 = vpack.c.b16 %v1488, %v1486
    %v1677 = vpack.c.b16 %v1489, %v1487
    %v1678 = vpack.c.b16 %v1492, %v1490
    %v1679 = vpack.c.b16 %v1493, %v1491
    %v1680 = vpack.c.b16 %v1496, %v1494
    %v1681 = vpack.c.b16 %v1497, %v1495
    %v1682 = vpack.c.b16 %v1500, %v1498
    %v1683 = vpack.c.b16 %v1501, %v1499
    %v1684 = vpack.c.b16 %v1504, %v1502
    %v1685 = vpack.c.b16 %v1505, %v1503
    %v1686 = vpack.c.b16 %v1508, %v1506
    %v1687 = vpack.c.b16 %v1509, %v1507
    %v1688 = vpack.c.b16 %v1512, %v1510
    %v1689 = vpack.c.b16 %v1513, %v1511
    %v1690 = vpack.c.b16 %v1516, %v1514
    %v1691 = vpack.c.b16 %v1517, %v1515
    %v1692 = vpack.c.b16 %v1520, %v1518
    %v1693 = vpack.c.b16 %v1521, %v1519
    %v1694 = vpack.c.b16 %v1524, %v1522
    %v1695 = vpack.c.b16 %v1525, %v1523
    %v1696 = vpack.c.b16 %v1528, %v1526
    %v1697 = vpack.c.b16 %v1529, %v1527
    %v1698 = vpack.c.b16 %v1532, %v1530
    %v1699 = vpack.c.b16 %v1533, %v1531
    %v1700 = vpack.c.b16 %v1536, %v1534
    %v1701 = vpack.c.b16 %v1537, %v1535
    %v1702 = vpack.c.b16 %v1540, %v1538
    %v1703 = vpack.c.b16 %v1541, %v1539
    %v1704 = vpack.c.b16 %v1544, %v1542
    %v1705 = vpack.c.b16 %v1545, %v1543
    %v1706 = vpack.c.b16 %v1548, %v1546
    %v1707 = vpack.c.b16 %v1549, %v1547
    %v1708 = vpack.c.b16 %v1552, %v1550
    %v1709 = vpack.c.b16 %v1553, %v1551
    %v1710 = vpack.c.b16 %v1556, %v1554
    %v1711 = vpack.c.b16 %v1557, %v1555
    %v1712 = vpack.c.b16 %v1560, %v1558
    %v1713 = vpack.c.b16 %v1561, %v1559
    %v1714 = vpack.c.b16 %v1564, %v1562
    %v1715 = vpack.c.b16 %v1565, %v1563
    %v1716 = vpack.c.b16 %v1568, %v1566
    %v1717 = vpack.c.b16 %v1569, %v1567
    %v1718 = vpack.c.b16 %v1572, %v1570
    %v1719 = vpack.c.b16 %v1573, %v1571
    %v1720 = vpack.c.b16 %v1576, %v1574
    %v1721 = vpack.c.b16 %v1577, %v1575
    %v1722 = vpack.c.b16 %v1580, %v1578
    %v1723 = vpack.c.b16 %v1581, %v1579
    %v1724 = vpack.c.b16 %v1584, %v1582
    %v1725 = vpack.c.b16 %v1585, %v1583
    %v1726 = vpack.c.b16 %v1588, %v1586
    %v1727 = vpack.c.b16 %v1589, %v1587
    %v1728 = vpack.c.b16 %v1592, %v1590
    %v1729 = vpack.c.b16 %v1593, %v1591
    %v1730 = vpack.c.b16 %v1596, %v1594
    %v1731 = vpack.c.b16 %v1597, %v1595
    %v1732 = vpack.c.b16 %v1600, %v1598
    %v1733 = vpack.c.b16 %v1601, %v1599
    %v1734 = vpack.c.b16 %v1604, %v1602
    %v1735 = vpack.c.b16 %v1605, %v1603
    %v1736 = vpack.c.b16 %v1608, %v1606
    %v1737 = vpack.c.b16 %v1609, %v1607
    %1866 = vmatprep.subr.bf16.mxu0 %v1611
    %1867 = vmatpush1.bf16.msra.mxu0 %v1610
    %1868 = vmatprep.subr.bf16.mxu0 %v1613
    %1869 = vmatpush1.bf16.msra.mxu0 %v1612
    %1870 = vmatprep.subr.bf16.mxu0 %v1615
    %1871 = vmatpush1.bf16.msra.mxu0 %v1614
    %1872 = vmatprep.subr.bf16.mxu0 %v1617
    %1873 = vmatpush1.bf16.msra.mxu0 %v1616
    %1874 = vmatprep.subr.bf16.mxu0 %v1619
    %1875 = vmatpush1.bf16.msra.mxu0 %v1618
    %1876 = vmatprep.subr.bf16.mxu0 %v1621
    %1877 = vmatpush1.bf16.msra.mxu0 %v1620
    %1878 = vmatprep.subr.bf16.mxu0 %v1623
    %1879 = vmatpush1.bf16.msra.mxu0 %v1622
    %1880 = vmatprep.subr.bf16.mxu0 %v1625
    %1881 = vmatpush1.bf16.msra.mxu0 %v1624
    %1882 = vmatprep.subr.bf16.mxu0 %v1627
    %1883 = vmatpush1.bf16.msra.mxu0 %v1626
    %1884 = vmatprep.subr.bf16.mxu0 %v1629
    %1885 = vmatpush1.bf16.msra.mxu0 %v1628
    %1886 = vmatprep.subr.bf16.mxu0 %v1631
    %1887 = vmatpush1.bf16.msra.mxu0 %v1630
    %1888 = vmatprep.subr.bf16.mxu0 %v1633
    %1889 = vmatpush1.bf16.msra.mxu0 %v1632
    %1890 = vmatprep.subr.bf16.mxu0 %v1635
    %1891 = vmatpush1.bf16.msra.mxu0 %v1634
    %1892 = vmatprep.subr.bf16.mxu0 %v1637
    %1893 = vmatpush1.bf16.msra.mxu0 %v1636
    %1894 = vmatprep.subr.bf16.mxu0 %v1639
    %1895 = vmatpush1.bf16.msra.mxu0 %v1638
    %1896 = vmatprep.subr.bf16.mxu0 %v1641
    %1897 = vmatpush1.bf16.msra.mxu0 %v1640
    %1898 = vmatprep.mubr.bf16.mxu0 %v1079
    %1899 = vmatmul.mubr.bf16.gmra.mrb[0].mxu0 %v1078
    %v1900 = vpop.f32.mrb[0].mxu0
    %v1901 = vadd.f32 %v1219, %v1900
    %v1902 = vpop.f32.mrb[0].mxu0
    %v1903 = vadd.f32 %v1223, %v1902
    %v1904 = vpop.f32.mrb[0].mxu0
    %v1905 = vadd.f32 %v1219, %v1904
    %v1906 = vpop.f32.mrb[0].mxu0
    %v1907 = vadd.f32 %v1223, %v1906
    %1908 = vdwg.mxu0
    %1909 = vmatprep.subr.bf16.mxu0 %v1643
    %1910 = vmatpush1.bf16.msra.mxu0 %v1642
    %1911 = vmatprep.subr.bf16.mxu0 %v1645
    %1912 = vmatpush1.bf16.msra.mxu0 %v1644
    %1913 = vmatprep.subr.bf16.mxu0 %v1647
    %1914 = vmatpush1.bf16.msra.mxu0 %v1646
    %1915 = vmatprep.subr.bf16.mxu0 %v1649
    %1916 = vmatpush1.bf16.msra.mxu0 %v1648
    %1917 = vmatprep.subr.bf16.mxu0 %v1651
    %1918 = vmatpush1.bf16.msra.mxu0 %v1650
    %1919 = vmatprep.subr.bf16.mxu0 %v1653
    %1920 = vmatpush1.bf16.msra.mxu0 %v1652
    %1921 = vmatprep.subr.bf16.mxu0 %v1655
    %1922 = vmatpush1.bf16.msra.mxu0 %v1654
    %1923 = vmatprep.subr.bf16.mxu0 %v1657
    %1924 = vmatpush1.bf16.msra.mxu0 %v1656
    %1925 = vmatprep.subr.bf16.mxu0 %v1659
    %1926 = vmatpush1.bf16.msra.mxu0 %v1658
    %1927 = vmatprep.subr.bf16.mxu0 %v1661
    %1928 = vmatpush1.bf16.msra.mxu0 %v1660
    %1929 = vmatprep.subr.bf16.mxu0 %v1663
    %1930 = vmatpush1.bf16.msra.mxu0 %v1662
    %1931 = vmatprep.subr.bf16.mxu0 %v1665
    %1932 = vmatpush1.bf16.msra.mxu0 %v1664
    %1933 = vmatprep.subr.bf16.mxu0 %v1667
    %1934 = vmatpush1.bf16.msra.mxu0 %v1666
    %1935 = vmatprep.subr.bf16.mxu0 %v1669
    %1936 = vmatpush1.bf16.msra.mxu0 %v1668
    %1937 = vmatprep.subr.bf16.mxu0 %v1671
    %1938 = vmatpush1.bf16.msra.mxu0 %v1670
    %1939 = vmatprep.subr.bf16.mxu0 %v1673
    %1940 = vmatpush1.bf16.msra.mxu0 %v1672
    %1941 = vmatprep.mubr.bf16.mxu0 %v1081
    %1942 = vmatmul.mubr.bf16.gmra.mrb[0].mxu0 %v1080
    %v1943 = vpop.f32.mrb[0].mxu0
    %v1944 = vadd.f32 %v1901, %v1943
    %v1945 = vpop.f32.mrb[0].mxu0
    %v1946 = vadd.f32 %v1903, %v1945
    %v1947 = vpop.f32.mrb[0].mxu0
    %v1948 = vadd.f32 %v1905, %v1947
    %v1949 = vpop.f32.mrb[0].mxu0
    %v1950 = vadd.f32 %v1907, %v1949
    %1951 = vdwg.mxu0
    %1952 = vmatprep.subr.bf16.mxu0 %v1675
    %1953 = vmatpush1.bf16.msra.mxu0 %v1674
    %1954 = vmatprep.subr.bf16.mxu0 %v1677
    %1955 = vmatpush1.bf16.msra.mxu0 %v1676
    %1956 = vmatprep.subr.bf16.mxu0 %v1679
    %1957 = vmatpush1.bf16.msra.mxu0 %v1678
    %1958 = vmatprep.subr.bf16.mxu0 %v1681
    %1959 = vmatpush1.bf16.msra.mxu0 %v1680
    %1960 = vmatprep.subr.bf16.mxu0 %v1683
    %1961 = vmatpush1.bf16.msra.mxu0 %v1682
    %1962 = vmatprep.subr.bf16.mxu0 %v1685
    %1963 = vmatpush1.bf16.msra.mxu0 %v1684
    %1964 = vmatprep.subr.bf16.mxu0 %v1687
    %1965 = vmatpush1.bf16.msra.mxu0 %v1686
    %1966 = vmatprep.subr.bf16.mxu0 %v1689
    %1967 = vmatpush1.bf16.msra.mxu0 %v1688
    %1968 = vmatprep.subr.bf16.mxu0 %v1691
    %1969 = vmatpush1.bf16.msra.mxu0 %v1690
    %1970 = vmatprep.subr.bf16.mxu0 %v1693
    %1971 = vmatpush1.bf16.msra.mxu0 %v1692
    %1972 = vmatprep.subr.bf16.mxu0 %v1695
    %1973 = vmatpush1.bf16.msra.mxu0 %v1694
    %1974 = vmatprep.subr.bf16.mxu0 %v1697
    %1975 = vmatpush1.bf16.msra.mxu0 %v1696
    %1976 = vmatprep.subr.bf16.mxu0 %v1699
    %1977 = vmatpush1.bf16.msra.mxu0 %v1698
    %1978 = vmatprep.subr.bf16.mxu0 %v1701
    %1979 = vmatpush1.bf16.msra.mxu0 %v1700
    %1980 = vmatprep.subr.bf16.mxu0 %v1703
    %1981 = vmatpush1.bf16.msra.mxu0 %v1702
    %1982 = vmatprep.subr.bf16.mxu0 %v1705
    %1983 = vmatpush1.bf16.msra.mxu0 %v1704
    %1984 = vmatprep.mubr.bf16.mxu0 %v1083
    %1985 = vmatmul.mubr.bf16.gmra.mrb[0].mxu0 %v1082
    %v1986 = vpop.f32.mrb[0].mxu0
    %v1987 = vadd.f32 %v1944, %v1986
    %v1988 = vpop.f32.mrb[0].mxu0
    %v1989 = vadd.f32 %v1946, %v1988
    %v1990 = vpop.f32.mrb[0].mxu0
    %v1991 = vadd.f32 %v1948, %v1990
    %v1992 = vpop.f32.mrb[0].mxu0
    %v1993 = vadd.f32 %v1950, %v1992
    %1994 = vdwg.mxu0
    %1995 = vmatprep.subr.bf16.mxu0 %v1707
    %1996 = vmatpush1.bf16.msra.mxu0 %v1706
    %1997 = vmatprep.subr.bf16.mxu0 %v1709
    %1998 = vmatpush1.bf16.msra.mxu0 %v1708
    %1999 = vmatprep.subr.bf16.mxu0 %v1711
    %2000 = vmatpush1.bf16.msra.mxu0 %v1710
    %2001 = vmatprep.subr.bf16.mxu0 %v1713
    %2002 = vmatpush1.bf16.msra.mxu0 %v1712
    %2003 = vmatprep.subr.bf16.mxu0 %v1715
    %2004 = vmatpush1.bf16.msra.mxu0 %v1714
    %2005 = vmatprep.subr.bf16.mxu0 %v1717
    %2006 = vmatpush1.bf16.msra.mxu0 %v1716
    %2007 = vmatprep.subr.bf16.mxu0 %v1719
    %2008 = vmatpush1.bf16.msra.mxu0 %v1718
    %2009 = vmatprep.subr.bf16.mxu0 %v1721
    %2010 = vmatpush1.bf16.msra.mxu0 %v1720
    %2011 = vmatprep.subr.bf16.mxu0 %v1723
    %2012 = vmatpush1.bf16.msra.mxu0 %v1722
    %2013 = vmatprep.subr.bf16.mxu0 %v1725
    %2014 = vmatpush1.bf16.msra.mxu0 %v1724
    %2015 = vmatprep.subr.bf16.mxu0 %v1727
    %2016 = vmatpush1.bf16.msra.mxu0 %v1726
    %2017 = vmatprep.subr.bf16.mxu0 %v1729
    %2018 = vmatpush1.bf16.msra.mxu0 %v1728
    %2019 = vmatprep.subr.bf16.mxu0 %v1731
    %2020 = vmatpush1.bf16.msra.mxu0 %v1730
    %2021 = vmatprep.subr.bf16.mxu0 %v1733
    %2022 = vmatpush1.bf16.msra.mxu0 %v1732
    %2023 = vmatprep.subr.bf16.mxu0 %v1735
    %2024 = vmatpush1.bf16.msra.mxu0 %v1734
    %2025 = vmatprep.subr.bf16.mxu0 %v1737
    %2026 = vmatpush1.bf16.msra.mxu0 %v1736
    %2027 = vmatprep.mubr.bf16.mxu0 %v1085
    %2028 = vmatmul.mubr.bf16.gmra.mrb[0].mxu0 %v1084
    %v2029 = vpop.f32.mrb[0].mxu0
    %v2030 = vadd.f32 %v1987, %v2029
    %v2031 = vpop.f32.mrb[0].mxu0
    %v2032 = vadd.f32 %v1989, %v2031
    %v2033 = vpop.f32.mrb[0].mxu0
    %v2034 = vadd.f32 %v1991, %v2033
    %v2035 = vpop.f32.mrb[0].mxu0
    %v2036 = vadd.f32 %v1993, %v2035
    %2037 = vdwg.mxu0
    %2038 = vst [vmem:[#allocation10] sm:$0xff] %v2030
    %2039 = vst [vmem:[#allocation10 + $0x8] sm:$0xff] %v2032
    %2040 = vst [vmem:[#allocation10 + $0x10] sm:$0xff] %v2034
    %2041 = vst [vmem:[#allocation10 + $0x18] sm:$0xff] %v2036
    // Predicated region
    $region38: #{tpu_custom_call.1} parent=1 // pred_check
      _
    $region39: #{tpu_custom_call.1} parent=1 // pred_check_branch
      %2043 = sbr.rel (0) target = $region41
    $region40: #{tpu_custom_call.1} parent=1 // pred_region
      %s2045 = ssub.s32 512, 512
      %2046 = vsyncadd [#allocation4], %s2045
      %s2047 = sshll.u32 [#allocation10], 4
      %s2048 = int_to_ptr.vmem [resolvable:$true] %s2047
      %2053 = dma.vmem_to_hbm [thread:$0]  %s2048, 512, %s5, [#allocation4], 256, 256, 16
    $region41: #{tpu_custom_call.1} parent=1 // pred_fallthru
      _
    // Predicated region
    $region42: #{tpu_custom_call.1} parent=1 // pred_check
      _
    $region43: #{tpu_custom_call.1} parent=1 // pred_check_branch
      %2055 = sbr.rel (0) target = $region45
    $region44: #{tpu_custom_call.1} parent=1 // pred_region
      %2056 = dma.done [#allocation4], 512
    $region45: #{tpu_custom_call.1} parent=1 // pred_fallthru
      _
    %2057 = vsyncpa [#allocation3], 1
    %2058 = vsyncpa [#allocation6], 1
    %2059 = vsyncpa [#allocation9], 1
    %2060 = vsyncpa [#allocation4], 1

</llo_original>
